<compile_context>
chip_gen: v5e
topology: v5e:2x2
jax: 0.10.0
libtpu: 0.0.40
codegen_flags: <defaults>
</compile_context>

<pallas_src>
import jax
import jax.numpy as jnp
from jax.experimental import pallas as pl
from jax.experimental.pallas import tpu as pltpu


def _scaled_conv_kernel(s_ref, w_ref, x_ref, o_ref):
    # s_ref: (1, Cin) f32   -- runtime SE scale
    # w_ref: (CoutBlk, Cin) bf16 -- pre-converted constant weight slab
    # x_ref: (Cin, HW) f32  -- activation, cast to bf16 here (hides under DMA)
    # o_ref: (CoutBlk, HW) f32
    w_scaled = (w_ref[...].astype(jnp.float32) * s_ref[...]).astype(jnp.bfloat16)
    x_bf = x_ref[...].astype(jnp.bfloat16)
    o_ref[...] = jnp.dot(w_scaled, x_bf, preferred_element_type=jnp.float32)


def prepare_weight(weight_oi11):
    """One-time setup: (Cout, Cin, 1, 1) f32 -> (Cout, Cin) bf16 (constant)."""
    Cout, Cin = weight_oi11.shape[0], weight_oi11.shape[1]
    return weight_oi11.reshape(Cout, Cin).astype(jnp.bfloat16)


def _is_dual_tensorcore():
    # v7x has 2 TensorCores per chip; v5e/v6e have 1.
    try:
        kind = jax.devices()[0].device_kind.lower()
    except Exception:
        return False
    return "v7" in kind


def scaled_pointwise_conv(x_nchw, scale_nc11, w_mat_bf16):
    """x_nchw: (1, Cin, H, W) f32; scale_nc11: (1, Cin, 1, 1) f32;
    w_mat_bf16: (Cout, Cin) bf16 (from prepare_weight)."""
    N, Cin, H, W = x_nchw.shape
    Cout = w_mat_bf16.shape[0]
    assert scale_nc11.shape == (N, Cin, 1, 1)
    assert w_mat_bf16.shape == (Cout, Cin)
    assert N == 1, "kernel written for the module's batch of 1"

    M = H * W
    # Free reshapes in NCHW (no transposes), no dtype conversion of x here.
    x_mat = x_nchw.reshape(Cin, M)                       # (Cin, HW) f32
    s_mat = scale_nc11.reshape(1, Cin).astype(jnp.float32)  # (1, Cin) f32

    # Generation-conditional Cout split: only worth it with 2 TensorCores.
    if _is_dual_tensorcore() and Cout % 2 == 0:
        cout_blk, grid, dim_sem = Cout // 2, (2,), ("parallel",)
    else:
        cout_blk, grid, dim_sem = Cout, (1,), ("arbitrary",)

    cost = pl.CostEstimate(
        flops=2 * Cout * Cin * M,
        transcendentals=0,
        bytes_accessed=(Cin * M * 4) + (Cout * Cin * 2) + (Cin * 4) + (Cout * M * 4),
    )

    out_mat = pl.pallas_call(
        _scaled_conv_kernel,
        out_shape=jax.ShapeDtypeStruct((Cout, M), jnp.float32),
        grid_spec=pltpu.PrefetchScalarGridSpec(
            num_scalar_prefetch=0,
            grid=grid,
            in_specs=[
                pl.BlockSpec((1, Cin), lambda j: (0, 0)),          # scale
                pl.BlockSpec((cout_blk, Cin), lambda j: (j, 0)),   # weight slab
                pl.BlockSpec((Cin, M), lambda j: (0, 0)),          # activation
            ],
            out_specs=pl.BlockSpec((cout_blk, M), lambda j: (j, 0)),
        ),
        compiler_params=pltpu.CompilerParams(
            dimension_semantics=dim_sem,
        ),
        cost_estimate=cost,
    )(s_mat, w_mat_bf16, x_mat)

    # (Cout, HW) -> (1, Cout, H, W): free reshape.
    return out_mat.reshape(N, Cout, H, W)


if __name__ == "__main__":
    # Shapes implied by the module: x262 (1,1056,14,14), x267 (1,1056,1,1),
    # Conv2d(1056, 176, 1x1, bias=False).
    N, Cin, H, W, Cout = 1, 1056, 14, 14, 176

    key = jax.random.PRNGKey(0)
    k1, k2, k3 = jax.random.split(key, 3)
    x262 = jax.random.normal(k1, (N, Cin, H, W), dtype=jnp.float32)
    x267 = jax.random.normal(k2, (N, Cin, 1, 1), dtype=jnp.float32)
    weight = jax.random.normal(k3, (Cout, Cin, 1, 1), dtype=jnp.float32) * 0.02

    # Constant weight converted ONCE (outside the per-call path).
    w_bf16 = prepare_weight(weight)

    fn = jax.jit(scaled_pointwise_conv)
    out = jax.block_until_ready(fn(x262, x267, w_bf16))

    # Reference in plain JAX f32 (broadcast mul + 1x1 conv via einsum).
    ref = jnp.einsum("nchw,oc->nohw", x262 * x267, weight.reshape(Cout, Cin))
    assert out.shape == (N, Cout, H, W)
    # bf16 MXU operands (f32 accumulation) -> loosened tolerance.
    assert jnp.allclose(out, ref, atol=5e-2, rtol=5e-2), float(
        jnp.max(jnp.abs(out - ref))
    )
    print("KERNEL_OK")
</pallas_src>

<mosaic_0001>
module attributes {stable_mosaic.version = 11 : i64} {
  func.func @_scaled_conv_kernel(%arg0: i32, %arg1: memref<1x1056xf32, #tpu.memory_space<vmem>>, %arg2: memref<176x1056xbf16, #tpu.memory_space<vmem>>, %arg3: memref<1056x196xf32, #tpu.memory_space<vmem>>, %arg4: memref<176x196xf32, #tpu.memory_space<vmem>>) attributes {dimension_semantics = [#tpu.dimension_semantics<arbitrary>], iteration_bounds = array<i64: 1>, scalar_prefetch = 0 : i64, scratch_operands = 0 : i64, tpu.core_type = #tpu.core_type<tc>, window_params = [{pipeline_mode = #tpu.pipeline_mode<synchronous>, transform_indices = @transform_0, window_bounds = array<i64: 1, 1056>}, {transform_indices = @transform_1, window_bounds = array<i64: 176, 1056>}, {pipeline_mode = #tpu.pipeline_mode<synchronous>, transform_indices = @transform_2, window_bounds = array<i64: 1056, 196>}, {transform_indices = @transform_3, window_bounds = array<i64: 176, 196>}]} {
    %c0 = arith.constant 0 : index
    %c0_0 = arith.constant 0 : index
    %0 = vector.load %arg2[%c0, %c0_0] : memref<176x1056xbf16, #tpu.memory_space<vmem>>, vector<176x1056xbf16>
    %1 = arith.extf %0 : vector<176x1056xbf16> to vector<176x1056xf32>
    %c0_1 = arith.constant 0 : index
    %c0_2 = arith.constant 0 : index
    %2 = vector.load %arg1[%c0_1, %c0_2] : memref<1x1056xf32, #tpu.memory_space<vmem>>, vector<1x1056xf32>
    %3 = vector.broadcast %2 : vector<1x1056xf32> to vector<176x1056xf32>
    %4 = arith.mulf %1, %3 : vector<176x1056xf32>
    %5 = arith.truncf %4 : vector<176x1056xf32> to vector<176x1056xbf16>
    %c0_3 = arith.constant 0 : index
    %c0_4 = arith.constant 0 : index
    %6 = vector.load %arg3[%c0_3, %c0_4] : memref<1056x196xf32, #tpu.memory_space<vmem>>, vector<1056x196xf32>
    %7 = arith.truncf %6 : vector<1056x196xf32> to vector<1056x196xbf16>
    %cst = arith.constant dense<0.000000e+00> : vector<176x196xf32>
    %8 = tpu.matmul %5, %7, %cst {dimension_numbers = #tpu.dot_dimension_numbers<[1], [0], [0], [1], [0, 0, 1, 1], [], []>} : vector<176x1056xbf16>, vector<1056x196xbf16>, vector<176x196xf32> -> vector<176x196xf32>
    %c0_5 = arith.constant 0 : index
    %c0_6 = arith.constant 0 : index
    %9 = vector.load %arg4[%c0_5, %c0_6] : memref<176x196xf32, #tpu.memory_space<vmem>>, vector<176x196xf32>
    tpu.vector_store %arg4[%c0_5, %c0_6], %8 {strides = array<i32>} : memref<176x196xf32, #tpu.memory_space<vmem>>, vector<176x196xf32>,
    return
  }
  func.func @transform_0(%arg0: i32) -> (i32, i32) {
    %c0_i32 = arith.constant 0 : i32
    %c0_i32_0 = arith.constant 0 : i32
    %c0_i32_1 = arith.constant 0 : i32
    return %c0_i32, %c0_i32_0 : i32, i32
  }
  func.func @transform_1(%arg0: i32) -> (i32, i32) {
    %c0_i32 = arith.constant 0 : i32
    %c0_i32_0 = arith.constant 0 : i32
    return %arg0, %c0_i32 : i32, i32
  }
  func.func @transform_2(%arg0: i32) -> (i32, i32) {
    %c0_i32 = arith.constant 0 : i32
    %c0_i32_0 = arith.constant 0 : i32
    %c0_i32_1 = arith.constant 0 : i32
    return %c0_i32, %c0_i32_0 : i32, i32
  }
  func.func @transform_3(%arg0: i32) -> (i32, i32) {
    %c0_i32 = arith.constant 0 : i32
    %c0_i32_0 = arith.constant 0 : i32
    return %arg0, %c0_i32 : i32, i32
  }
}

</mosaic_0001>

<llo_original>
// kernel: scaled_pointwise_conv.1
$region0: #{scaled_pointwise_conv.1}
  #allocation0 [shape = 'u32[]', space=smem, size = 0x4, offset = 0x4, fixed_abs, tag = 'smem constant byte address 0x4 - core index']
  #allocation1 [shape = 'u32[72,128]{1,0:T(1,128)}', space=vmem, size = 0x9000, scoped, tag = 'internal scratch']
  %s0 = inlined_call_operand.vmem [shape: f32[1,1056], index: 0, kind: input, shape index: {}]
  %s1 = inlined_call_operand.vmem [shape: bf16[176,1056], index: 1, kind: input, shape index: {}]
  %s2 = inlined_call_operand.vmem [shape: f32[1056,196], index: 2, kind: input, shape index: {}]
  %s3 = inlined_call_operand.vmem [shape: f32[176,196], index: 3, kind: output, shape index: {}]
  %s4 = sld [smem:[#allocation0]]
  $region22: #{scaled_pointwise_conv.1} parent=0
    _
  %s6 = ssub.s32 1, %s4
  %s7 = scalar_select 0, %s6, %s4
  // Predicated region
  $region2: #{scaled_pointwise_conv.1} parent=0 // pred_check
    _
  $region3: #{scaled_pointwise_conv.1} parent=0 // pred_check_branch
    %9 = sbr.rel (0) target = $region5
  $region4: #{scaled_pointwise_conv.1} parent=0 // pred_region
    _
  $region5: #{scaled_pointwise_conv.1} parent=0 // pred_fallthru
    _
  // Predicated region
  $region6: #{scaled_pointwise_conv.1} parent=0 // pred_check
    _
  $region7: #{scaled_pointwise_conv.1} parent=0 // pred_check_branch
    %11 = sbr.rel (0) target = $region9
  $region8: #{scaled_pointwise_conv.1} parent=0 // pred_region
    _
  $region9: #{scaled_pointwise_conv.1} parent=0 // pred_fallthru
    _
  // Predicated region
  $region10: #{scaled_pointwise_conv.1} parent=0 // pred_check
    _
  $region11: #{scaled_pointwise_conv.1} parent=0 // pred_check_branch
    %13 = sbr.rel (0) target = $region13
  $region12: #{scaled_pointwise_conv.1} parent=0 // pred_region
    _
  $region13: #{scaled_pointwise_conv.1} parent=0 // pred_fallthru
    _
  %v15 = vld [vmem:[%s1] sm:$0xff]
  %v16 = vld [vmem:[%s1 + $0x8] sm:$0xff]
  %v17 = vld [vmem:[%s1 + $0x10] sm:$0xff]
  %v18 = vld [vmem:[%s1 + $0x18] sm:$0xff]
  %v19 = vld [vmem:[%s1 + $0x20] sm:$0xf]
  %v20 = vld [vmem:[%s1 + $0x24] sm:$0xff]
  %v21 = vld [vmem:[%s1 + $0x2c] sm:$0xff]
  %v22 = vld [vmem:[%s1 + $0x34] sm:$0xff]
  %v23 = vld [vmem:[%s1 + $0x3c] sm:$0xff]
  %v24 = vld [vmem:[%s1 + $0x44] sm:$0xf]
  %v25 = vld [vmem:[%s1 + $0x48] sm:$0xff]
  %v26 = vld [vmem:[%s1 + $0x50] sm:$0xff]
  %v27 = vld [vmem:[%s1 + $0x58] sm:$0xff]
  %v28 = vld [vmem:[%s1 + $0x60] sm:$0xff]
  %v29 = vld [vmem:[%s1 + $0x68] sm:$0xf]
  %v30 = vld [vmem:[%s1 + $0x6c] sm:$0xff]
  %v31 = vld [vmem:[%s1 + $0x74] sm:$0xff]
  %v32 = vld [vmem:[%s1 + $0x7c] sm:$0xff]
  %v33 = vld [vmem:[%s1 + $0x84] sm:$0xff]
  %v34 = vld [vmem:[%s1 + $0x8c] sm:$0xf]
  %v35 = vld [vmem:[%s1 + $0x90] sm:$0xff]
  %v36 = vld [vmem:[%s1 + $0x98] sm:$0xff]
  %v37 = vld [vmem:[%s1 + $0xa0] sm:$0xff]
  %v38 = vld [vmem:[%s1 + $0xa8] sm:$0xff]
  %v39 = vld [vmem:[%s1 + $0xb0] sm:$0xf]
  %v40 = vld [vmem:[%s1 + $0xb4] sm:$0xff]
  %v41 = vld [vmem:[%s1 + $0xbc] sm:$0xff]
  %v42 = vld [vmem:[%s1 + $0xc4] sm:$0xff]
  %v43 = vld [vmem:[%s1 + $0xcc] sm:$0xff]
  %v44 = vld [vmem:[%s1 + $0xd4] sm:$0xf]
  %v45 = vld [vmem:[%s1 + $0xd8] sm:$0xff]
  %v46 = vld [vmem:[%s1 + $0xe0] sm:$0xff]
  %v47 = vld [vmem:[%s1 + $0xe8] sm:$0xff]
  %v48 = vld [vmem:[%s1 + $0xf0] sm:$0xff]
  %v49 = vld [vmem:[%s1 + $0xf8] sm:$0xf]
  %v50 = vld [vmem:[%s1 + $0xfc] sm:$0xff]
  %v51 = vld [vmem:[%s1 + $0x104] sm:$0xff]
  %v52 = vld [vmem:[%s1 + $0x10c] sm:$0xff]
  %v53 = vld [vmem:[%s1 + $0x114] sm:$0xff]
  %v54 = vld [vmem:[%s1 + $0x11c] sm:$0xf]
  %v55 = vld [vmem:[%s1 + $0x120] sm:$0xff]
  %v56 = vld [vmem:[%s1 + $0x128] sm:$0xff]
  %v57 = vld [vmem:[%s1 + $0x130] sm:$0xff]
  %v58 = vld [vmem:[%s1 + $0x138] sm:$0xff]
  %v59 = vld [vmem:[%s1 + $0x140] sm:$0xf]
  %v60 = vld [vmem:[%s1 + $0x144] sm:$0xff]
  %v61 = vld [vmem:[%s1 + $0x14c] sm:$0xff]
  %v62 = vld [vmem:[%s1 + $0x154] sm:$0xff]
  %v63 = vld [vmem:[%s1 + $0x15c] sm:$0xff]
  %v64 = vld [vmem:[%s1 + $0x164] sm:$0xf]
  %v65 = vld [vmem:[%s1 + $0x168] sm:$0xff]
  %v66 = vld [vmem:[%s1 + $0x170] sm:$0xff]
  %v67 = vld [vmem:[%s1 + $0x178] sm:$0xff]
  %v68 = vld [vmem:[%s1 + $0x180] sm:$0xff]
  %v69 = vld [vmem:[%s1 + $0x188] sm:$0xf]
  %v70 = vld [vmem:[%s1 + $0x18c] sm:$0xff]
  %v71 = vld [vmem:[%s1 + $0x194] sm:$0xff]
  %v72 = vld [vmem:[%s1 + $0x19c] sm:$0xff]
  %v73 = vld [vmem:[%s1 + $0x1a4] sm:$0xff]
  %v74 = vld [vmem:[%s1 + $0x1ac] sm:$0xf]
  %v75 = vld [vmem:[%s1 + $0x1b0] sm:$0xff]
  %v76 = vld [vmem:[%s1 + $0x1b8] sm:$0xff]
  %v77 = vld [vmem:[%s1 + $0x1c0] sm:$0xff]
  %v78 = vld [vmem:[%s1 + $0x1c8] sm:$0xff]
  %v79 = vld [vmem:[%s1 + $0x1d0] sm:$0xf]
  %v80 = vld [vmem:[%s1 + $0x1d4] sm:$0xff]
  %v81 = vld [vmem:[%s1 + $0x1dc] sm:$0xff]
  %v82 = vld [vmem:[%s1 + $0x1e4] sm:$0xff]
  %v83 = vld [vmem:[%s1 + $0x1ec] sm:$0xff]
  %v84 = vld [vmem:[%s1 + $0x1f4] sm:$0xf]
  %v85 = vld [vmem:[%s1 + $0x1f8] sm:$0xff]
  %v86 = vld [vmem:[%s1 + $0x200] sm:$0xff]
  %v87 = vld [vmem:[%s1 + $0x208] sm:$0xff]
  %v88 = vld [vmem:[%s1 + $0x210] sm:$0xff]
  %v89 = vld [vmem:[%s1 + $0x218] sm:$0xf]
  %v90 = vld [vmem:[%s1 + $0x21c] sm:$0xff]
  %v91 = vld [vmem:[%s1 + $0x224] sm:$0xff]
  %v92 = vld [vmem:[%s1 + $0x22c] sm:$0xff]
  %v93 = vld [vmem:[%s1 + $0x234] sm:$0xff]
  %v94 = vld [vmem:[%s1 + $0x23c] sm:$0xf]
  %v95 = vld [vmem:[%s1 + $0x240] sm:$0xff]
  %v96 = vld [vmem:[%s1 + $0x248] sm:$0xff]
  %v97 = vld [vmem:[%s1 + $0x250] sm:$0xff]
  %v98 = vld [vmem:[%s1 + $0x258] sm:$0xff]
  %v99 = vld [vmem:[%s1 + $0x260] sm:$0xf]
  %v100 = vld [vmem:[%s1 + $0x264] sm:$0xff]
  %v101 = vld [vmem:[%s1 + $0x26c] sm:$0xff]
  %v102 = vld [vmem:[%s1 + $0x274] sm:$0xff]
  %v103 = vld [vmem:[%s1 + $0x27c] sm:$0xff]
  %v104 = vld [vmem:[%s1 + $0x284] sm:$0xf]
  %v105 = vld [vmem:[%s1 + $0x288] sm:$0xff]
  %v106 = vld [vmem:[%s1 + $0x290] sm:$0xff]
  %v107 = vld [vmem:[%s1 + $0x298] sm:$0xff]
  %v108 = vld [vmem:[%s1 + $0x2a0] sm:$0xff]
  %v109 = vld [vmem:[%s1 + $0x2a8] sm:$0xf]
  %v110 = vld [vmem:[%s1 + $0x2ac] sm:$0xff]
  %v111 = vld [vmem:[%s1 + $0x2b4] sm:$0xff]
  %v112 = vld [vmem:[%s1 + $0x2bc] sm:$0xff]
  %v113 = vld [vmem:[%s1 + $0x2c4] sm:$0xff]
  %v114 = vld [vmem:[%s1 + $0x2cc] sm:$0xf]
  %v115 = vld [vmem:[%s1 + $0x2d0] sm:$0xff]
  %v116 = vld [vmem:[%s1 + $0x2d8] sm:$0xff]
  %v117 = vld [vmem:[%s1 + $0x2e0] sm:$0xff]
  %v118 = vld [vmem:[%s1 + $0x2e8] sm:$0xff]
  %v119 = vld [vmem:[%s1 + $0x2f0] sm:$0xf]
  %v120 = vld [vmem:[%s1 + $0x2f4] sm:$0xff]
  %v121 = vld [vmem:[%s1 + $0x2fc] sm:$0xff]
  %v122 = vld [vmem:[%s1 + $0x304] sm:$0xff]
  %v123 = vld [vmem:[%s1 + $0x30c] sm:$0xff]
  %v124 = vld [vmem:[%s1 + $0x314] sm:$0xf]
  %v125 = vunpack.c.l.bf16 %v15
  %v126 = vunpack.c.h.bf16 %v15
  %v127 = vunpack.c.l.bf16 %v16
  %v128 = vunpack.c.h.bf16 %v16
  %v129 = vunpack.c.l.bf16 %v17
  %v130 = vunpack.c.h.bf16 %v17
  %v131 = vunpack.c.l.bf16 %v18
  %v132 = vunpack.c.h.bf16 %v18
  %v133 = vunpack.c.l.bf16 %v19
  %v134 = vunpack.c.l.bf16 %v20
  %v135 = vunpack.c.h.bf16 %v20
  %v136 = vunpack.c.l.bf16 %v21
  %v137 = vunpack.c.h.bf16 %v21
  %v138 = vunpack.c.l.bf16 %v22
  %v139 = vunpack.c.h.bf16 %v22
  %v140 = vunpack.c.l.bf16 %v23
  %v141 = vunpack.c.h.bf16 %v23
  %v142 = vunpack.c.l.bf16 %v24
  %v143 = vunpack.c.l.bf16 %v25
  %v144 = vunpack.c.h.bf16 %v25
  %v145 = vunpack.c.l.bf16 %v26
  %v146 = vunpack.c.h.bf16 %v26
  %v147 = vunpack.c.l.bf16 %v27
  %v148 = vunpack.c.h.bf16 %v27
  %v149 = vunpack.c.l.bf16 %v28
  %v150 = vunpack.c.h.bf16 %v28
  %v151 = vunpack.c.l.bf16 %v29
  %v152 = vunpack.c.l.bf16 %v30
  %v153 = vunpack.c.h.bf16 %v30
  %v154 = vunpack.c.l.bf16 %v31
  %v155 = vunpack.c.h.bf16 %v31
  %v156 = vunpack.c.l.bf16 %v32
  %v157 = vunpack.c.h.bf16 %v32
  %v158 = vunpack.c.l.bf16 %v33
  %v159 = vunpack.c.h.bf16 %v33
  %v160 = vunpack.c.l.bf16 %v34
  %v161 = vunpack.c.l.bf16 %v35
  %v162 = vunpack.c.h.bf16 %v35
  %v163 = vunpack.c.l.bf16 %v36
  %v164 = vunpack.c.h.bf16 %v36
  %v165 = vunpack.c.l.bf16 %v37
  %v166 = vunpack.c.h.bf16 %v37
  %v167 = vunpack.c.l.bf16 %v38
  %v168 = vunpack.c.h.bf16 %v38
  %v169 = vunpack.c.l.bf16 %v39
  %v170 = vunpack.c.l.bf16 %v40
  %v171 = vunpack.c.h.bf16 %v40
  %v172 = vunpack.c.l.bf16 %v41
  %v173 = vunpack.c.h.bf16 %v41
  %v174 = vunpack.c.l.bf16 %v42
  %v175 = vunpack.c.h.bf16 %v42
  %v176 = vunpack.c.l.bf16 %v43
  %v177 = vunpack.c.h.bf16 %v43
  %v178 = vunpack.c.l.bf16 %v44
  %v179 = vunpack.c.l.bf16 %v45
  %v180 = vunpack.c.h.bf16 %v45
  %v181 = vunpack.c.l.bf16 %v46
  %v182 = vunpack.c.h.bf16 %v46
  %v183 = vunpack.c.l.bf16 %v47
  %v184 = vunpack.c.h.bf16 %v47
  %v185 = vunpack.c.l.bf16 %v48
  %v186 = vunpack.c.h.bf16 %v48
  %v187 = vunpack.c.l.bf16 %v49
  %v188 = vunpack.c.l.bf16 %v50
  %v189 = vunpack.c.h.bf16 %v50
  %v190 = vunpack.c.l.bf16 %v51
  %v191 = vunpack.c.h.bf16 %v51
  %v192 = vunpack.c.l.bf16 %v52
  %v193 = vunpack.c.h.bf16 %v52
  %v194 = vunpack.c.l.bf16 %v53
  %v195 = vunpack.c.h.bf16 %v53
  %v196 = vunpack.c.l.bf16 %v54
  %v197 = vunpack.c.l.bf16 %v55
  %v198 = vunpack.c.h.bf16 %v55
  %v199 = vunpack.c.l.bf16 %v56
  %v200 = vunpack.c.h.bf16 %v56
  %v201 = vunpack.c.l.bf16 %v57
  %v202 = vunpack.c.h.bf16 %v57
  %v203 = vunpack.c.l.bf16 %v58
  %v204 = vunpack.c.h.bf16 %v58
  %v205 = vunpack.c.l.bf16 %v59
  %v206 = vunpack.c.l.bf16 %v60
  %v207 = vunpack.c.h.bf16 %v60
  %v208 = vunpack.c.l.bf16 %v61
  %v209 = vunpack.c.h.bf16 %v61
  %v210 = vunpack.c.l.bf16 %v62
  %v211 = vunpack.c.h.bf16 %v62
  %v212 = vunpack.c.l.bf16 %v63
  %v213 = vunpack.c.h.bf16 %v63
  %v214 = vunpack.c.l.bf16 %v64
  %v215 = vunpack.c.l.bf16 %v65
  %v216 = vunpack.c.h.bf16 %v65
  %v217 = vunpack.c.l.bf16 %v66
  %v218 = vunpack.c.h.bf16 %v66
  %v219 = vunpack.c.l.bf16 %v67
  %v220 = vunpack.c.h.bf16 %v67
  %v221 = vunpack.c.l.bf16 %v68
  %v222 = vunpack.c.h.bf16 %v68
  %v223 = vunpack.c.l.bf16 %v69
  %v224 = vunpack.c.l.bf16 %v70
  %v225 = vunpack.c.h.bf16 %v70
  %v226 = vunpack.c.l.bf16 %v71
  %v227 = vunpack.c.h.bf16 %v71
  %v228 = vunpack.c.l.bf16 %v72
  %v229 = vunpack.c.h.bf16 %v72
  %v230 = vunpack.c.l.bf16 %v73
  %v231 = vunpack.c.h.bf16 %v73
  %v232 = vunpack.c.l.bf16 %v74
  %v233 = vunpack.c.l.bf16 %v75
  %v234 = vunpack.c.h.bf16 %v75
  %v235 = vunpack.c.l.bf16 %v76
  %v236 = vunpack.c.h.bf16 %v76
  %v237 = vunpack.c.l.bf16 %v77
  %v238 = vunpack.c.h.bf16 %v77
  %v239 = vunpack.c.l.bf16 %v78
  %v240 = vunpack.c.h.bf16 %v78
  %v241 = vunpack.c.l.bf16 %v79
  %v242 = vunpack.c.l.bf16 %v80
  %v243 = vunpack.c.h.bf16 %v80
  %v244 = vunpack.c.l.bf16 %v81
  %v245 = vunpack.c.h.bf16 %v81
  %v246 = vunpack.c.l.bf16 %v82
  %v247 = vunpack.c.h.bf16 %v82
  %v248 = vunpack.c.l.bf16 %v83
  %v249 = vunpack.c.h.bf16 %v83
  %v250 = vunpack.c.l.bf16 %v84
  %v251 = vunpack.c.l.bf16 %v85
  %v252 = vunpack.c.h.bf16 %v85
  %v253 = vunpack.c.l.bf16 %v86
  %v254 = vunpack.c.h.bf16 %v86
  %v255 = vunpack.c.l.bf16 %v87
  %v256 = vunpack.c.h.bf16 %v87
  %v257 = vunpack.c.l.bf16 %v88
  %v258 = vunpack.c.h.bf16 %v88
  %v259 = vunpack.c.l.bf16 %v89
  %v260 = vunpack.c.l.bf16 %v90
  %v261 = vunpack.c.h.bf16 %v90
  %v262 = vunpack.c.l.bf16 %v91
  %v263 = vunpack.c.h.bf16 %v91
  %v264 = vunpack.c.l.bf16 %v92
  %v265 = vunpack.c.h.bf16 %v92
  %v266 = vunpack.c.l.bf16 %v93
  %v267 = vunpack.c.h.bf16 %v93
  %v268 = vunpack.c.l.bf16 %v94
  %v269 = vunpack.c.l.bf16 %v95
  %v270 = vunpack.c.h.bf16 %v95
  %v271 = vunpack.c.l.bf16 %v96
  %v272 = vunpack.c.h.bf16 %v96
  %v273 = vunpack.c.l.bf16 %v97
  %v274 = vunpack.c.h.bf16 %v97
  %v275 = vunpack.c.l.bf16 %v98
  %v276 = vunpack.c.h.bf16 %v98
  %v277 = vunpack.c.l.bf16 %v99
  %v278 = vunpack.c.l.bf16 %v100
  %v279 = vunpack.c.h.bf16 %v100
  %v280 = vunpack.c.l.bf16 %v101
  %v281 = vunpack.c.h.bf16 %v101
  %v282 = vunpack.c.l.bf16 %v102
  %v283 = vunpack.c.h.bf16 %v102
  %v284 = vunpack.c.l.bf16 %v103
  %v285 = vunpack.c.h.bf16 %v103
  %v286 = vunpack.c.l.bf16 %v104
  %v287 = vunpack.c.l.bf16 %v105
  %v288 = vunpack.c.h.bf16 %v105
  %v289 = vunpack.c.l.bf16 %v106
  %v290 = vunpack.c.h.bf16 %v106
  %v291 = vunpack.c.l.bf16 %v107
  %v292 = vunpack.c.h.bf16 %v107
  %v293 = vunpack.c.l.bf16 %v108
  %v294 = vunpack.c.h.bf16 %v108
  %v295 = vunpack.c.l.bf16 %v109
  %v296 = vunpack.c.l.bf16 %v110
  %v297 = vunpack.c.h.bf16 %v110
  %v298 = vunpack.c.l.bf16 %v111
  %v299 = vunpack.c.h.bf16 %v111
  %v300 = vunpack.c.l.bf16 %v112
  %v301 = vunpack.c.h.bf16 %v112
  %v302 = vunpack.c.l.bf16 %v113
  %v303 = vunpack.c.h.bf16 %v113
  %v304 = vunpack.c.l.bf16 %v114
  %v305 = vunpack.c.l.bf16 %v115
  %v306 = vunpack.c.h.bf16 %v115
  %v307 = vunpack.c.l.bf16 %v116
  %v308 = vunpack.c.h.bf16 %v116
  %v309 = vunpack.c.l.bf16 %v117
  %v310 = vunpack.c.h.bf16 %v117
  %v311 = vunpack.c.l.bf16 %v118
  %v312 = vunpack.c.h.bf16 %v118
  %v313 = vunpack.c.l.bf16 %v119
  %v314 = vunpack.c.l.bf16 %v120
  %v315 = vunpack.c.h.bf16 %v120
  %v316 = vunpack.c.l.bf16 %v121
  %v317 = vunpack.c.h.bf16 %v121
  %v318 = vunpack.c.l.bf16 %v122
  %v319 = vunpack.c.h.bf16 %v122
  %v320 = vunpack.c.l.bf16 %v123
  %v321 = vunpack.c.h.bf16 %v123
  %v322 = vunpack.c.l.bf16 %v124
  %v323 = vld [vmem:[%s0] sm:$0xff]
  %v324 = vld [vmem:[%s0 + $0x8] sm:$0x1]
  %v327 = vperm.slane %v323, 0
  %v328 = vperm.slane %v323, 1
  %v329 = vperm.slane %v323, 2
  %v330 = vperm.slane %v323, 3
  %v331 = vperm.slane %v323, 4
  %v332 = vperm.slane %v323, 5
  %v333 = vperm.slane %v323, 6
  %v334 = vperm.slane %v323, 7
  %v335 = vperm.slane %v324, 0
  %v345 = vmul.f32 %v125, %v327
  %v346 = vmul.f32 %v126, %v328
  %v347 = vmul.f32 %v127, %v329
  %v348 = vmul.f32 %v128, %v330
  %v349 = vmul.f32 %v129, %v331
  %v350 = vmul.f32 %v130, %v332
  %v351 = vmul.f32 %v131, %v333
  %v352 = vmul.f32 %v132, %v334
  %v353 = vmul.f32 %v133, %v335
  %v354 = vmul.f32 %v134, %v327
  %v355 = vmul.f32 %v135, %v328
  %v356 = vmul.f32 %v136, %v329
  %v357 = vmul.f32 %v137, %v330
  %v358 = vmul.f32 %v138, %v331
  %v359 = vmul.f32 %v139, %v332
  %v360 = vmul.f32 %v140, %v333
  %v361 = vmul.f32 %v141, %v334
  %v362 = vmul.f32 %v142, %v335
  %v363 = vmul.f32 %v143, %v327
  %v364 = vmul.f32 %v144, %v328
  %v365 = vmul.f32 %v145, %v329
  %v366 = vmul.f32 %v146, %v330
  %v367 = vmul.f32 %v147, %v331
  %v368 = vmul.f32 %v148, %v332
  %v369 = vmul.f32 %v149, %v333
  %v370 = vmul.f32 %v150, %v334
  %v371 = vmul.f32 %v151, %v335
  %v372 = vmul.f32 %v152, %v327
  %v373 = vmul.f32 %v153, %v328
  %v374 = vmul.f32 %v154, %v329
  %v375 = vmul.f32 %v155, %v330
  %v376 = vmul.f32 %v156, %v331
  %v377 = vmul.f32 %v157, %v332
  %v378 = vmul.f32 %v158, %v333
  %v379 = vmul.f32 %v159, %v334
  %v380 = vmul.f32 %v160, %v335
  %v381 = vmul.f32 %v161, %v327
  %v382 = vmul.f32 %v162, %v328
  %v383 = vmul.f32 %v163, %v329
  %v384 = vmul.f32 %v164, %v330
  %v385 = vmul.f32 %v165, %v331
  %v386 = vmul.f32 %v166, %v332
  %v387 = vmul.f32 %v167, %v333
  %v388 = vmul.f32 %v168, %v334
  %v389 = vmul.f32 %v169, %v335
  %v390 = vmul.f32 %v170, %v327
  %v391 = vmul.f32 %v171, %v328
  %v392 = vmul.f32 %v172, %v329
  %v393 = vmul.f32 %v173, %v330
  %v394 = vmul.f32 %v174, %v331
  %v395 = vmul.f32 %v175, %v332
  %v396 = vmul.f32 %v176, %v333
  %v397 = vmul.f32 %v177, %v334
  %v398 = vmul.f32 %v178, %v335
  %v399 = vmul.f32 %v179, %v327
  %v400 = vmul.f32 %v180, %v328
  %v401 = vmul.f32 %v181, %v329
  %v402 = vmul.f32 %v182, %v330
  %v403 = vmul.f32 %v183, %v331
  %v404 = vmul.f32 %v184, %v332
  %v405 = vmul.f32 %v185, %v333
  %v406 = vmul.f32 %v186, %v334
  %v407 = vmul.f32 %v187, %v335
  %v408 = vmul.f32 %v188, %v327
  %v409 = vmul.f32 %v189, %v328
  %v410 = vmul.f32 %v190, %v329
  %v411 = vmul.f32 %v191, %v330
  %v412 = vmul.f32 %v192, %v331
  %v413 = vmul.f32 %v193, %v332
  %v414 = vmul.f32 %v194, %v333
  %v415 = vmul.f32 %v195, %v334
  %v416 = vmul.f32 %v196, %v335
  %v417 = vmul.f32 %v197, %v327
  %v418 = vmul.f32 %v198, %v328
  %v419 = vmul.f32 %v199, %v329
  %v420 = vmul.f32 %v200, %v330
  %v421 = vmul.f32 %v201, %v331
  %v422 = vmul.f32 %v202, %v332
  %v423 = vmul.f32 %v203, %v333
  %v424 = vmul.f32 %v204, %v334
  %v425 = vmul.f32 %v205, %v335
  %v426 = vmul.f32 %v206, %v327
  %v427 = vmul.f32 %v207, %v328
  %v428 = vmul.f32 %v208, %v329
  %v429 = vmul.f32 %v209, %v330
  %v430 = vmul.f32 %v210, %v331
  %v431 = vmul.f32 %v211, %v332
  %v432 = vmul.f32 %v212, %v333
  %v433 = vmul.f32 %v213, %v334
  %v434 = vmul.f32 %v214, %v335
  %v435 = vmul.f32 %v215, %v327
  %v436 = vmul.f32 %v216, %v328
  %v437 = vmul.f32 %v217, %v329
  %v438 = vmul.f32 %v218, %v330
  %v439 = vmul.f32 %v219, %v331
  %v440 = vmul.f32 %v220, %v332
  %v441 = vmul.f32 %v221, %v333
  %v442 = vmul.f32 %v222, %v334
  %v443 = vmul.f32 %v223, %v335
  %v444 = vmul.f32 %v224, %v327
  %v445 = vmul.f32 %v225, %v328
  %v446 = vmul.f32 %v226, %v329
  %v447 = vmul.f32 %v227, %v330
  %v448 = vmul.f32 %v228, %v331
  %v449 = vmul.f32 %v229, %v332
  %v450 = vmul.f32 %v230, %v333
  %v451 = vmul.f32 %v231, %v334
  %v452 = vmul.f32 %v232, %v335
  %v453 = vmul.f32 %v233, %v327
  %v454 = vmul.f32 %v234, %v328
  %v455 = vmul.f32 %v235, %v329
  %v456 = vmul.f32 %v236, %v330
  %v457 = vmul.f32 %v237, %v331
  %v458 = vmul.f32 %v238, %v332
  %v459 = vmul.f32 %v239, %v333
  %v460 = vmul.f32 %v240, %v334
  %v461 = vmul.f32 %v241, %v335
  %v462 = vmul.f32 %v242, %v327
  %v463 = vmul.f32 %v243, %v328
  %v464 = vmul.f32 %v244, %v329
  %v465 = vmul.f32 %v245, %v330
  %v466 = vmul.f32 %v246, %v331
  %v467 = vmul.f32 %v247, %v332
  %v468 = vmul.f32 %v248, %v333
  %v469 = vmul.f32 %v249, %v334
  %v470 = vmul.f32 %v250, %v335
  %v471 = vmul.f32 %v251, %v327
  %v472 = vmul.f32 %v252, %v328
  %v473 = vmul.f32 %v253, %v329
  %v474 = vmul.f32 %v254, %v330
  %v475 = vmul.f32 %v255, %v331
  %v476 = vmul.f32 %v256, %v332
  %v477 = vmul.f32 %v257, %v333
  %v478 = vmul.f32 %v258, %v334
  %v479 = vmul.f32 %v259, %v335
  %v480 = vmul.f32 %v260, %v327
  %v481 = vmul.f32 %v261, %v328
  %v482 = vmul.f32 %v262, %v329
  %v483 = vmul.f32 %v263, %v330
  %v484 = vmul.f32 %v264, %v331
  %v485 = vmul.f32 %v265, %v332
  %v486 = vmul.f32 %v266, %v333
  %v487 = vmul.f32 %v267, %v334
  %v488 = vmul.f32 %v268, %v335
  %v489 = vmul.f32 %v269, %v327
  %v490 = vmul.f32 %v270, %v328
  %v491 = vmul.f32 %v271, %v329
  %v492 = vmul.f32 %v272, %v330
  %v493 = vmul.f32 %v273, %v331
  %v494 = vmul.f32 %v274, %v332
  %v495 = vmul.f32 %v275, %v333
  %v496 = vmul.f32 %v276, %v334
  %v497 = vmul.f32 %v277, %v335
  %v498 = vmul.f32 %v278, %v327
  %v499 = vmul.f32 %v279, %v328
  %v500 = vmul.f32 %v280, %v329
  %v501 = vmul.f32 %v281, %v330
  %v502 = vmul.f32 %v282, %v331
  %v503 = vmul.f32 %v283, %v332
  %v504 = vmul.f32 %v284, %v333
  %v505 = vmul.f32 %v285, %v334
  %v506 = vmul.f32 %v286, %v335
  %v507 = vmul.f32 %v287, %v327
  %v508 = vmul.f32 %v288, %v328
  %v509 = vmul.f32 %v289, %v329
  %v510 = vmul.f32 %v290, %v330
  %v511 = vmul.f32 %v291, %v331
  %v512 = vmul.f32 %v292, %v332
  %v513 = vmul.f32 %v293, %v333
  %v514 = vmul.f32 %v294, %v334
  %v515 = vmul.f32 %v295, %v335
  %v516 = vmul.f32 %v296, %v327
  %v517 = vmul.f32 %v297, %v328
  %v518 = vmul.f32 %v298, %v329
  %v519 = vmul.f32 %v299, %v330
  %v520 = vmul.f32 %v300, %v331
  %v521 = vmul.f32 %v301, %v332
  %v522 = vmul.f32 %v302, %v333
  %v523 = vmul.f32 %v303, %v334
  %v524 = vmul.f32 %v304, %v335
  %v525 = vmul.f32 %v305, %v327
  %v526 = vmul.f32 %v306, %v328
  %v527 = vmul.f32 %v307, %v329
  %v528 = vmul.f32 %v308, %v330
  %v529 = vmul.f32 %v309, %v331
  %v530 = vmul.f32 %v310, %v332
  %v531 = vmul.f32 %v311, %v333
  %v532 = vmul.f32 %v312, %v334
  %v533 = vmul.f32 %v313, %v335
  %v534 = vmul.f32 %v314, %v327
  %v535 = vmul.f32 %v315, %v328
  %v536 = vmul.f32 %v316, %v329
  %v537 = vmul.f32 %v317, %v330
  %v538 = vmul.f32 %v318, %v331
  %v539 = vmul.f32 %v319, %v332
  %v540 = vmul.f32 %v320, %v333
  %v541 = vmul.f32 %v321, %v334
  %v542 = vmul.f32 %v322, %v335
  %v543 = vpack.c.bf16 %v354, %v345
  %v544 = vpack.c.bf16 %v355, %v346
  %v545 = vpack.c.bf16 %v356, %v347
  %v546 = vpack.c.bf16 %v357, %v348
  %v547 = vpack.c.bf16 %v358, %v349
  %v548 = vpack.c.bf16 %v359, %v350
  %v549 = vpack.c.bf16 %v360, %v351
  %v550 = vpack.c.bf16 %v361, %v352
  %v551 = vpack.c.bf16 %v362, %v353
  %v552 = vpack.c.bf16 %v372, %v363
  %v553 = vpack.c.bf16 %v373, %v364
  %v554 = vpack.c.bf16 %v374, %v365
  %v555 = vpack.c.bf16 %v375, %v366
  %v556 = vpack.c.bf16 %v376, %v367
  %v557 = vpack.c.bf16 %v377, %v368
  %v558 = vpack.c.bf16 %v378, %v369
  %v559 = vpack.c.bf16 %v379, %v370
  %v560 = vpack.c.bf16 %v380, %v371
  %v561 = vpack.c.bf16 %v390, %v381
  %v562 = vpack.c.bf16 %v391, %v382
  %v563 = vpack.c.bf16 %v392, %v383
  %v564 = vpack.c.bf16 %v393, %v384
  %v565 = vpack.c.bf16 %v394, %v385
  %v566 = vpack.c.bf16 %v395, %v386
  %v567 = vpack.c.bf16 %v396, %v387
  %v568 = vpack.c.bf16 %v397, %v388
  %v569 = vpack.c.bf16 %v398, %v389
  %v570 = vpack.c.bf16 %v408, %v399
  %v571 = vpack.c.bf16 %v409, %v400
  %v572 = vpack.c.bf16 %v410, %v401
  %v573 = vpack.c.bf16 %v411, %v402
  %v574 = vpack.c.bf16 %v412, %v403
  %v575 = vpack.c.bf16 %v413, %v404
  %v576 = vpack.c.bf16 %v414, %v405
  %v577 = vpack.c.bf16 %v415, %v406
  %v578 = vpack.c.bf16 %v416, %v407
  %v579 = vpack.c.bf16 %v426, %v417
  %v580 = vpack.c.bf16 %v427, %v418
  %v581 = vpack.c.bf16 %v428, %v419
  %v582 = vpack.c.bf16 %v429, %v420
  %v583 = vpack.c.bf16 %v430, %v421
  %v584 = vpack.c.bf16 %v431, %v422
  %v585 = vpack.c.bf16 %v432, %v423
  %v586 = vpack.c.bf16 %v433, %v424
  %v587 = vpack.c.bf16 %v434, %v425
  %v588 = vpack.c.bf16 %v444, %v435
  %v589 = vpack.c.bf16 %v445, %v436
  %v590 = vpack.c.bf16 %v446, %v437
  %v591 = vpack.c.bf16 %v447, %v438
  %v592 = vpack.c.bf16 %v448, %v439
  %v593 = vpack.c.bf16 %v449, %v440
  %v594 = vpack.c.bf16 %v450, %v441
  %v595 = vpack.c.bf16 %v451, %v442
  %v596 = vpack.c.bf16 %v452, %v443
  %v597 = vpack.c.bf16 %v462, %v453
  %v598 = vpack.c.bf16 %v463, %v454
  %v599 = vpack.c.bf16 %v464, %v455
  %v600 = vpack.c.bf16 %v465, %v456
  %v601 = vpack.c.bf16 %v466, %v457
  %v602 = vpack.c.bf16 %v467, %v458
  %v603 = vpack.c.bf16 %v468, %v459
  %v604 = vpack.c.bf16 %v469, %v460
  %v605 = vpack.c.bf16 %v470, %v461
  %v606 = vpack.c.bf16 %v480, %v471
  %v607 = vpack.c.bf16 %v481, %v472
  %v608 = vpack.c.bf16 %v482, %v473
  %v609 = vpack.c.bf16 %v483, %v474
  %v610 = vpack.c.bf16 %v484, %v475
  %v611 = vpack.c.bf16 %v485, %v476
  %v612 = vpack.c.bf16 %v486, %v477
  %v613 = vpack.c.bf16 %v487, %v478
  %v614 = vpack.c.bf16 %v488, %v479
  %v615 = vpack.c.bf16 %v498, %v489
  %v616 = vpack.c.bf16 %v499, %v490
  %v617 = vpack.c.bf16 %v500, %v491
  %v618 = vpack.c.bf16 %v501, %v492
  %v619 = vpack.c.bf16 %v502, %v493
  %v620 = vpack.c.bf16 %v503, %v494
  %v621 = vpack.c.bf16 %v504, %v495
  %v622 = vpack.c.bf16 %v505, %v496
  %v623 = vpack.c.bf16 %v506, %v497
  %v624 = vpack.c.bf16 %v516, %v507
  %v625 = vpack.c.bf16 %v517, %v508
  %v626 = vpack.c.bf16 %v518, %v509
  %v627 = vpack.c.bf16 %v519, %v510
  %v628 = vpack.c.bf16 %v520, %v511
  %v629 = vpack.c.bf16 %v521, %v512
  %v630 = vpack.c.bf16 %v522, %v513
  %v631 = vpack.c.bf16 %v523, %v514
  %v632 = vpack.c.bf16 %v524, %v515
  %v633 = vpack.c.bf16 %v534, %v525
  %v634 = vpack.c.bf16 %v535, %v526
  %v635 = vpack.c.bf16 %v536, %v527
  %v636 = vpack.c.bf16 %v537, %v528
  %v637 = vpack.c.bf16 %v538, %v529
  %v638 = vpack.c.bf16 %v539, %v530
  %v639 = vpack.c.bf16 %v540, %v531
  %v640 = vpack.c.bf16 %v541, %v532
  %v641 = vpack.c.bf16 %v542, %v533
  %v642 = vld [vmem:[%s2] sm:$0xff]
  %v643 = vld [vmem:[%s2 + $0x8] sm:$0xff]
  %v644 = vld [vmem:[%s2 + $0x10] sm:$0xff]
  %v645 = vld [vmem:[%s2 + $0x18] sm:$0xff]
  %v646 = vld [vmem:[%s2 + $0x20] sm:$0xff]
  %v647 = vld [vmem:[%s2 + $0x28] sm:$0xff]
  %v648 = vld [vmem:[%s2 + $0x30] sm:$0xff]
  %v649 = vld [vmem:[%s2 + $0x38] sm:$0xff]
  %v650 = vld [vmem:[%s2 + $0x40] sm:$0xff]
  %v651 = vld [vmem:[%s2 + $0x48] sm:$0xff]
  %v652 = vld [vmem:[%s2 + $0x50] sm:$0xff]
  %v653 = vld [vmem:[%s2 + $0x58] sm:$0xff]
  %v654 = vld [vmem:[%s2 + $0x60] sm:$0xff]
  %v655 = vld [vmem:[%s2 + $0x68] sm:$0xff]
  %v656 = vld [vmem:[%s2 + $0x70] sm:$0xff]
  %v657 = vld [vmem:[%s2 + $0x78] sm:$0xff]
  %v658 = vld [vmem:[%s2 + $0x80] sm:$0xff]
  %v659 = vld [vmem:[%s2 + $0x88] sm:$0xff]
  %v660 = vld [vmem:[%s2 + $0x90] sm:$0xff]
  %v661 = vld [vmem:[%s2 + $0x98] sm:$0xff]
  %v662 = vld [vmem:[%s2 + $0xa0] sm:$0xff]
  %v663 = vld [vmem:[%s2 + $0xa8] sm:$0xff]
  %v664 = vld [vmem:[%s2 + $0xb0] sm:$0xff]
  %v665 = vld [vmem:[%s2 + $0xb8] sm:$0xff]
  %v666 = vld [vmem:[%s2 + $0xc0] sm:$0xff]
  %v667 = vld [vmem:[%s2 + $0xc8] sm:$0xff]
  %v668 = vld [vmem:[%s2 + $0xd0] sm:$0xff]
  %v669 = vld [vmem:[%s2 + $0xd8] sm:$0xff]
  %v670 = vld [vmem:[%s2 + $0xe0] sm:$0xff]
  %v671 = vld [vmem:[%s2 + $0xe8] sm:$0xff]
  %v672 = vld [vmem:[%s2 + $0xf0] sm:$0xff]
  %v673 = vld [vmem:[%s2 + $0xf8] sm:$0xff]
  %v674 = vld [vmem:[%s2 + $0x100] sm:$0xff]
  %v675 = vld [vmem:[%s2 + $0x108] sm:$0xff]
  %v676 = vld [vmem:[%s2 + $0x110] sm:$0xff]
  %v677 = vld [vmem:[%s2 + $0x118] sm:$0xff]
  %v678 = vld [vmem:[%s2 + $0x120] sm:$0xff]
  %v679 = vld [vmem:[%s2 + $0x128] sm:$0xff]
  %v680 = vld [vmem:[%s2 + $0x130] sm:$0xff]
  %v681 = vld [vmem:[%s2 + $0x138] sm:$0xff]
  %v682 = vld [vmem:[%s2 + $0x140] sm:$0xff]
  %v683 = vld [vmem:[%s2 + $0x148] sm:$0xff]
  %v684 = vld [vmem:[%s2 + $0x150] sm:$0xff]
  %v685 = vld [vmem:[%s2 + $0x158] sm:$0xff]
  %v686 = vld [vmem:[%s2 + $0x160] sm:$0xff]
  %v687 = vld [vmem:[%s2 + $0x168] sm:$0xff]
  %v688 = vld [vmem:[%s2 + $0x170] sm:$0xff]
  %v689 = vld [vmem:[%s2 + $0x178] sm:$0xff]
  %v690 = vld [vmem:[%s2 + $0x180] sm:$0xff]
  %v691 = vld [vmem:[%s2 + $0x188] sm:$0xff]
  %v692 = vld [vmem:[%s2 + $0x190] sm:$0xff]
  %v693 = vld [vmem:[%s2 + $0x198] sm:$0xff]
  %v694 = vld [vmem:[%s2 + $0x1a0] sm:$0xff]
  %v695 = vld [vmem:[%s2 + $0x1a8] sm:$0xff]
  %v696 = vld [vmem:[%s2 + $0x1b0] sm:$0xff]
  %v697 = vld [vmem:[%s2 + $0x1b8] sm:$0xff]
  %v698 = vld [vmem:[%s2 + $0x1c0] sm:$0xff]
  %v699 = vld [vmem:[%s2 + $0x1c8] sm:$0xff]
  %v700 = vld [vmem:[%s2 + $0x1d0] sm:$0xff]
  %v701 = vld [vmem:[%s2 + $0x1d8] sm:$0xff]
  %v702 = vld [vmem:[%s2 + $0x1e0] sm:$0xff]
  %v703 = vld [vmem:[%s2 + $0x1e8] sm:$0xff]
  %v704 = vld [vmem:[%s2 + $0x1f0] sm:$0xff]
  %v705 = vld [vmem:[%s2 + $0x1f8] sm:$0xff]
  %v706 = vld [vmem:[%s2 + $0x200] sm:$0xff]
  %v707 = vld [vmem:[%s2 + $0x208] sm:$0xff]
  %v708 = vld [vmem:[%s2 + $0x210] sm:$0xff]
  %v709 = vld [vmem:[%s2 + $0x218] sm:$0xff]
  %v710 = vld [vmem:[%s2 + $0x220] sm:$0xff]
  %v711 = vld [vmem:[%s2 + $0x228] sm:$0xff]
  %v712 = vld [vmem:[%s2 + $0x230] sm:$0xff]
  %v713 = vld [vmem:[%s2 + $0x238] sm:$0xff]
  %v714 = vld [vmem:[%s2 + $0x240] sm:$0xff]
  %v715 = vld [vmem:[%s2 + $0x248] sm:$0xff]
  %v716 = vld [vmem:[%s2 + $0x250] sm:$0xff]
  %v717 = vld [vmem:[%s2 + $0x258] sm:$0xff]
  %v718 = vld [vmem:[%s2 + $0x260] sm:$0xff]
  %v719 = vld [vmem:[%s2 + $0x268] sm:$0xff]
  %v720 = vld [vmem:[%s2 + $0x270] sm:$0xff]
  %v721 = vld [vmem:[%s2 + $0x278] sm:$0xff]
  %v722 = vld [vmem:[%s2 + $0x280] sm:$0xff]
  %v723 = vld [vmem:[%s2 + $0x288] sm:$0xff]
  %v724 = vld [vmem:[%s2 + $0x290] sm:$0xff]
  %v725 = vld [vmem:[%s2 + $0x298] sm:$0xff]
  %v726 = vld [vmem:[%s2 + $0x2a0] sm:$0xff]
  %v727 = vld [vmem:[%s2 + $0x2a8] sm:$0xff]
  %v728 = vld [vmem:[%s2 + $0x2b0] sm:$0xff]
  %v729 = vld [vmem:[%s2 + $0x2b8] sm:$0xff]
  %v730 = vld [vmem:[%s2 + $0x2c0] sm:$0xff]
  %v731 = vld [vmem:[%s2 + $0x2c8] sm:$0xff]
  %v732 = vld [vmem:[%s2 + $0x2d0] sm:$0xff]
  %v733 = vld [vmem:[%s2 + $0x2d8] sm:$0xff]
  %v734 = vld [vmem:[%s2 + $0x2e0] sm:$0xff]
  %v735 = vld [vmem:[%s2 + $0x2e8] sm:$0xff]
  %v736 = vld [vmem:[%s2 + $0x2f0] sm:$0xff]
  %v737 = vld [vmem:[%s2 + $0x2f8] sm:$0xff]
  %v738 = vld [vmem:[%s2 + $0x300] sm:$0xff]
  %v739 = vld [vmem:[%s2 + $0x308] sm:$0xff]
  %v740 = vld [vmem:[%s2 + $0x310] sm:$0xff]
  %v741 = vld [vmem:[%s2 + $0x318] sm:$0xff]
  %v742 = vld [vmem:[%s2 + $0x320] sm:$0xff]
  %v743 = vld [vmem:[%s2 + $0x328] sm:$0xff]
  %v744 = vld [vmem:[%s2 + $0x330] sm:$0xff]
  %v745 = vld [vmem:[%s2 + $0x338] sm:$0xff]
  %v746 = vld [vmem:[%s2 + $0x340] sm:$0xff]
  %v747 = vld [vmem:[%s2 + $0x348] sm:$0xff]
  %v748 = vld [vmem:[%s2 + $0x350] sm:$0xff]
  %v749 = vld [vmem:[%s2 + $0x358] sm:$0xff]
  %v750 = vld [vmem:[%s2 + $0x360] sm:$0xff]
  %v751 = vld [vmem:[%s2 + $0x368] sm:$0xff]
  %v752 = vld [vmem:[%s2 + $0x370] sm:$0xff]
  %v753 = vld [vmem:[%s2 + $0x378] sm:$0xff]
  %v754 = vld [vmem:[%s2 + $0x380] sm:$0xff]
  %v755 = vld [vmem:[%s2 + $0x388] sm:$0xff]
  %v756 = vld [vmem:[%s2 + $0x390] sm:$0xff]
  %v757 = vld [vmem:[%s2 + $0x398] sm:$0xff]
  %v758 = vld [vmem:[%s2 + $0x3a0] sm:$0xff]
  %v759 = vld [vmem:[%s2 + $0x3a8] sm:$0xff]
  %v760 = vld [vmem:[%s2 + $0x3b0] sm:$0xff]
  %v761 = vld [vmem:[%s2 + $0x3b8] sm:$0xff]
  %v762 = vld [vmem:[%s2 + $0x3c0] sm:$0xff]
  %v763 = vld [vmem:[%s2 + $0x3c8] sm:$0xff]
  %v764 = vld [vmem:[%s2 + $0x3d0] sm:$0xff]
  %v765 = vld [vmem:[%s2 + $0x3d8] sm:$0xff]
  %v766 = vld [vmem:[%s2 + $0x3e0] sm:$0xff]
  %v767 = vld [vmem:[%s2 + $0x3e8] sm:$0xff]
  %v768 = vld [vmem:[%s2 + $0x3f0] sm:$0xff]
  %v769 = vld [vmem:[%s2 + $0x3f8] sm:$0xff]
  %v770 = vld [vmem:[%s2 + $0x400] sm:$0xff]
  %v771 = vld [vmem:[%s2 + $0x408] sm:$0xff]
  %v772 = vld [vmem:[%s2 + $0x410] sm:$0xff]
  %v773 = vld [vmem:[%s2 + $0x418] sm:$0xff]
  %v774 = vld [vmem:[%s2 + $0x420] sm:$0xff]
  %v775 = vld [vmem:[%s2 + $0x428] sm:$0xff]
  %v776 = vld [vmem:[%s2 + $0x430] sm:$0xff]
  %v777 = vld [vmem:[%s2 + $0x438] sm:$0xff]
  %v778 = vld [vmem:[%s2 + $0x440] sm:$0xff]
  %v779 = vld [vmem:[%s2 + $0x448] sm:$0xff]
  %v780 = vld [vmem:[%s2 + $0x450] sm:$0xff]
  %v781 = vld [vmem:[%s2 + $0x458] sm:$0xff]
  %v782 = vld [vmem:[%s2 + $0x460] sm:$0xff]
  %v783 = vld [vmem:[%s2 + $0x468] sm:$0xff]
  %v784 = vld [vmem:[%s2 + $0x470] sm:$0xff]
  %v785 = vld [vmem:[%s2 + $0x478] sm:$0xff]
  %v786 = vld [vmem:[%s2 + $0x480] sm:$0xff]
  %v787 = vld [vmem:[%s2 + $0x488] sm:$0xff]
  %v788 = vld [vmem:[%s2 + $0x490] sm:$0xff]
  %v789 = vld [vmem:[%s2 + $0x498] sm:$0xff]
  %v790 = vld [vmem:[%s2 + $0x4a0] sm:$0xff]
  %v791 = vld [vmem:[%s2 + $0x4a8] sm:$0xff]
  %v792 = vld [vmem:[%s2 + $0x4b0] sm:$0xff]
  %v793 = vld [vmem:[%s2 + $0x4b8] sm:$0xff]
  %v794 = vld [vmem:[%s2 + $0x4c0] sm:$0xff]
  %v795 = vld [vmem:[%s2 + $0x4c8] sm:$0xff]
  %v796 = vld [vmem:[%s2 + $0x4d0] sm:$0xff]
  %v797 = vld [vmem:[%s2 + $0x4d8] sm:$0xff]
  %v798 = vld [vmem:[%s2 + $0x4e0] sm:$0xff]
  %v799 = vld [vmem:[%s2 + $0x4e8] sm:$0xff]
  %v800 = vld [vmem:[%s2 + $0x4f0] sm:$0xff]
  %v801 = vld [vmem:[%s2 + $0x4f8] sm:$0xff]
  %v802 = vld [vmem:[%s2 + $0x500] sm:$0xff]
  %v803 = vld [vmem:[%s2 + $0x508] sm:$0xff]
  %v804 = vld [vmem:[%s2 + $0x510] sm:$0xff]
  %v805 = vld [vmem:[%s2 + $0x518] sm:$0xff]
  %v806 = vld [vmem:[%s2 + $0x520] sm:$0xff]
  %v807 = vld [vmem:[%s2 + $0x528] sm:$0xff]
  %v808 = vld [vmem:[%s2 + $0x530] sm:$0xff]
  %v809 = vld [vmem:[%s2 + $0x538] sm:$0xff]
  %v810 = vld [vmem:[%s2 + $0x540] sm:$0xff]
  %v811 = vld [vmem:[%s2 + $0x548] sm:$0xff]
  %v812 = vld [vmem:[%s2 + $0x550] sm:$0xff]
  %v813 = vld [vmem:[%s2 + $0x558] sm:$0xff]
  %v814 = vld [vmem:[%s2 + $0x560] sm:$0xff]
  %v815 = vld [vmem:[%s2 + $0x568] sm:$0xff]
  %v816 = vld [vmem:[%s2 + $0x570] sm:$0xff]
  %v817 = vld [vmem:[%s2 + $0x578] sm:$0xff]
  %v818 = vld [vmem:[%s2 + $0x580] sm:$0xff]
  %v819 = vld [vmem:[%s2 + $0x588] sm:$0xff]
  %v820 = vld [vmem:[%s2 + $0x590] sm:$0xff]
  %v821 = vld [vmem:[%s2 + $0x598] sm:$0xff]
  %v822 = vld [vmem:[%s2 + $0x5a0] sm:$0xff]
  %v823 = vld [vmem:[%s2 + $0x5a8] sm:$0xff]
  %v824 = vld [vmem:[%s2 + $0x5b0] sm:$0xff]
  %v825 = vld [vmem:[%s2 + $0x5b8] sm:$0xff]
  %v826 = vld [vmem:[%s2 + $0x5c0] sm:$0xff]
  %v827 = vld [vmem:[%s2 + $0x5c8] sm:$0xff]
  %v828 = vld [vmem:[%s2 + $0x5d0] sm:$0xff]
  %v829 = vld [vmem:[%s2 + $0x5d8] sm:$0xff]
  %v830 = vld [vmem:[%s2 + $0x5e0] sm:$0xff]
  %v831 = vld [vmem:[%s2 + $0x5e8] sm:$0xff]
  %v832 = vld [vmem:[%s2 + $0x5f0] sm:$0xff]
  %v833 = vld [vmem:[%s2 + $0x5f8] sm:$0xff]
  %v834 = vld [vmem:[%s2 + $0x600] sm:$0xff]
  %v835 = vld [vmem:[%s2 + $0x608] sm:$0xff]
  %v836 = vld [vmem:[%s2 + $0x610] sm:$0xff]
  %v837 = vld [vmem:[%s2 + $0x618] sm:$0xff]
  %v838 = vld [vmem:[%s2 + $0x620] sm:$0xff]
  %v839 = vld [vmem:[%s2 + $0x628] sm:$0xff]
  %v840 = vld [vmem:[%s2 + $0x630] sm:$0xff]
  %v841 = vld [vmem:[%s2 + $0x638] sm:$0xff]
  %v842 = vld [vmem:[%s2 + $0x640] sm:$0xff]
  %v843 = vld [vmem:[%s2 + $0x648] sm:$0xff]
  %v844 = vld [vmem:[%s2 + $0x650] sm:$0xff]
  %v845 = vld [vmem:[%s2 + $0x658] sm:$0xff]
  %v846 = vld [vmem:[%s2 + $0x660] sm:$0xff]
  %v847 = vld [vmem:[%s2 + $0x668] sm:$0xff]
  %v848 = vld [vmem:[%s2 + $0x670] sm:$0xff]
  %v849 = vld [vmem:[%s2 + $0x678] sm:$0xff]
  %v850 = vld [vmem:[%s2 + $0x680] sm:$0xff]
  %v851 = vld [vmem:[%s2 + $0x688] sm:$0xff]
  %v852 = vld [vmem:[%s2 + $0x690] sm:$0xff]
  %v853 = vld [vmem:[%s2 + $0x698] sm:$0xff]
  %v854 = vld [vmem:[%s2 + $0x6a0] sm:$0xff]
  %v855 = vld [vmem:[%s2 + $0x6a8] sm:$0xff]
  %v856 = vld [vmem:[%s2 + $0x6b0] sm:$0xff]
  %v857 = vld [vmem:[%s2 + $0x6b8] sm:$0xff]
  %v858 = vld [vmem:[%s2 + $0x6c0] sm:$0xff]
  %v859 = vld [vmem:[%s2 + $0x6c8] sm:$0xff]
  %v860 = vld [vmem:[%s2 + $0x6d0] sm:$0xff]
  %v861 = vld [vmem:[%s2 + $0x6d8] sm:$0xff]
  %v862 = vld [vmem:[%s2 + $0x6e0] sm:$0xff]
  %v863 = vld [vmem:[%s2 + $0x6e8] sm:$0xff]
  %v864 = vld [vmem:[%s2 + $0x6f0] sm:$0xff]
  %v865 = vld [vmem:[%s2 + $0x6f8] sm:$0xff]
  %v866 = vld [vmem:[%s2 + $0x700] sm:$0xff]
  %v867 = vld [vmem:[%s2 + $0x708] sm:$0xff]
  %v868 = vld [vmem:[%s2 + $0x710] sm:$0xff]
  %v869 = vld [vmem:[%s2 + $0x718] sm:$0xff]
  %v870 = vld [vmem:[%s2 + $0x720] sm:$0xff]
  %v871 = vld [vmem:[%s2 + $0x728] sm:$0xff]
  %v872 = vld [vmem:[%s2 + $0x730] sm:$0xff]
  %v873 = vld [vmem:[%s2 + $0x738] sm:$0xff]
  %v874 = vld [vmem:[%s2 + $0x740] sm:$0xff]
  %v875 = vld [vmem:[%s2 + $0x748] sm:$0xff]
  %v876 = vld [vmem:[%s2 + $0x750] sm:$0xff]
  %v877 = vld [vmem:[%s2 + $0x758] sm:$0xff]
  %v878 = vld [vmem:[%s2 + $0x760] sm:$0xff]
  %v879 = vld [vmem:[%s2 + $0x768] sm:$0xff]
  %v880 = vld [vmem:[%s2 + $0x770] sm:$0xff]
  %v881 = vld [vmem:[%s2 + $0x778] sm:$0xff]
  %v882 = vld [vmem:[%s2 + $0x780] sm:$0xff]
  %v883 = vld [vmem:[%s2 + $0x788] sm:$0xff]
  %v884 = vld [vmem:[%s2 + $0x790] sm:$0xff]
  %v885 = vld [vmem:[%s2 + $0x798] sm:$0xff]
  %v886 = vld [vmem:[%s2 + $0x7a0] sm:$0xff]
  %v887 = vld [vmem:[%s2 + $0x7a8] sm:$0xff]
  %v888 = vld [vmem:[%s2 + $0x7b0] sm:$0xff]
  %v889 = vld [vmem:[%s2 + $0x7b8] sm:$0xff]
  %v890 = vld [vmem:[%s2 + $0x7c0] sm:$0xff]
  %v891 = vld [vmem:[%s2 + $0x7c8] sm:$0xff]
  %v892 = vld [vmem:[%s2 + $0x7d0] sm:$0xff]
  %v893 = vld [vmem:[%s2 + $0x7d8] sm:$0xff]
  %v894 = vld [vmem:[%s2 + $0x7e0] sm:$0xff]
  %v895 = vld [vmem:[%s2 + $0x7e8] sm:$0xff]
  %v896 = vld [vmem:[%s2 + $0x7f0] sm:$0xff]
  %v897 = vld [vmem:[%s2 + $0x7f8] sm:$0xff]
  %v898 = vld [vmem:[%s2 + $0x800] sm:$0xff]
  %v899 = vld [vmem:[%s2 + $0x808] sm:$0xff]
  %v900 = vld [vmem:[%s2 + $0x810] sm:$0xff]
  %v901 = vld [vmem:[%s2 + $0x818] sm:$0xff]
  %v902 = vld [vmem:[%s2 + $0x820] sm:$0xff]
  %v903 = vld [vmem:[%s2 + $0x828] sm:$0xff]
  %v904 = vld [vmem:[%s2 + $0x830] sm:$0xff]
  %v905 = vld [vmem:[%s2 + $0x838] sm:$0xff]
  %v906 = vpack.c.bf16 %v644, %v642
  %v907 = vpack.c.bf16 %v645, %v643
  %v908 = vpack.c.bf16 %v648, %v646
  %v909 = vpack.c.bf16 %v649, %v647
  %v910 = vpack.c.bf16 %v652, %v650
  %v911 = vpack.c.bf16 %v653, %v651
  %v912 = vpack.c.bf16 %v656, %v654
  %v913 = vpack.c.bf16 %v657, %v655
  %v914 = vpack.c.bf16 %v660, %v658
  %v915 = vpack.c.bf16 %v661, %v659
  %v916 = vpack.c.bf16 %v664, %v662
  %v917 = vpack.c.bf16 %v665, %v663
  %v918 = vpack.c.bf16 %v668, %v666
  %v919 = vpack.c.bf16 %v669, %v667
  %v920 = vpack.c.bf16 %v672, %v670
  %v921 = vpack.c.bf16 %v673, %v671
  %v922 = vpack.c.bf16 %v676, %v674
  %v923 = vpack.c.bf16 %v677, %v675
  %v924 = vpack.c.bf16 %v680, %v678
  %v925 = vpack.c.bf16 %v681, %v679
  %v926 = vpack.c.bf16 %v684, %v682
  %v927 = vpack.c.bf16 %v685, %v683
  %v928 = vpack.c.bf16 %v688, %v686
  %v929 = vpack.c.bf16 %v689, %v687
  %v930 = vpack.c.bf16 %v692, %v690
  %v931 = vpack.c.bf16 %v693, %v691
  %v932 = vpack.c.bf16 %v696, %v694
  %v933 = vpack.c.bf16 %v697, %v695
  %v934 = vpack.c.bf16 %v700, %v698
  %v935 = vpack.c.bf16 %v701, %v699
  %v936 = vpack.c.bf16 %v704, %v702
  %v937 = vpack.c.bf16 %v705, %v703
  %v938 = vpack.c.bf16 %v708, %v706
  %v939 = vpack.c.bf16 %v709, %v707
  %v940 = vpack.c.bf16 %v712, %v710
  %v941 = vpack.c.bf16 %v713, %v711
  %v942 = vpack.c.bf16 %v716, %v714
  %v943 = vpack.c.bf16 %v717, %v715
  %v944 = vpack.c.bf16 %v720, %v718
  %v945 = vpack.c.bf16 %v721, %v719
  %v946 = vpack.c.bf16 %v724, %v722
  %v947 = vpack.c.bf16 %v725, %v723
  %v948 = vpack.c.bf16 %v728, %v726
  %v949 = vpack.c.bf16 %v729, %v727
  %v950 = vpack.c.bf16 %v732, %v730
  %v951 = vpack.c.bf16 %v733, %v731
  %v952 = vpack.c.bf16 %v736, %v734
  %v953 = vpack.c.bf16 %v737, %v735
  %v954 = vpack.c.bf16 %v740, %v738
  %v955 = vpack.c.bf16 %v741, %v739
  %v956 = vpack.c.bf16 %v744, %v742
  %v957 = vpack.c.bf16 %v745, %v743
  %v958 = vpack.c.bf16 %v748, %v746
  %v959 = vpack.c.bf16 %v749, %v747
  %v960 = vpack.c.bf16 %v752, %v750
  %v961 = vpack.c.bf16 %v753, %v751
  %v962 = vpack.c.bf16 %v756, %v754
  %v963 = vpack.c.bf16 %v757, %v755
  %v964 = vpack.c.bf16 %v760, %v758
  %v965 = vpack.c.bf16 %v761, %v759
  %v966 = vpack.c.bf16 %v764, %v762
  %v967 = vpack.c.bf16 %v765, %v763
  %v968 = vpack.c.bf16 %v768, %v766
  %v969 = vpack.c.bf16 %v769, %v767
  %v970 = vpack.c.bf16 %v772, %v770
  %v971 = vpack.c.bf16 %v773, %v771
  %v972 = vpack.c.bf16 %v776, %v774
  %v973 = vpack.c.bf16 %v777, %v775
  %v974 = vpack.c.bf16 %v780, %v778
  %v975 = vpack.c.bf16 %v781, %v779
  %v976 = vpack.c.bf16 %v784, %v782
  %v977 = vpack.c.bf16 %v785, %v783
  %v978 = vpack.c.bf16 %v788, %v786
  %v979 = vpack.c.bf16 %v789, %v787
  %v980 = vpack.c.bf16 %v792, %v790
  %v981 = vpack.c.bf16 %v793, %v791
  %v982 = vpack.c.bf16 %v796, %v794
  %v983 = vpack.c.bf16 %v797, %v795
  %v984 = vpack.c.bf16 %v800, %v798
  %v985 = vpack.c.bf16 %v801, %v799
  %v986 = vpack.c.bf16 %v804, %v802
  %v987 = vpack.c.bf16 %v805, %v803
  %v988 = vpack.c.bf16 %v808, %v806
  %v989 = vpack.c.bf16 %v809, %v807
  %v990 = vpack.c.bf16 %v812, %v810
  %v991 = vpack.c.bf16 %v813, %v811
  %v992 = vpack.c.bf16 %v816, %v814
  %v993 = vpack.c.bf16 %v817, %v815
  %v994 = vpack.c.bf16 %v820, %v818
  %v995 = vpack.c.bf16 %v821, %v819
  %v996 = vpack.c.bf16 %v824, %v822
  %v997 = vpack.c.bf16 %v825, %v823
  %v998 = vpack.c.bf16 %v828, %v826
  %v999 = vpack.c.bf16 %v829, %v827
  %v1000 = vpack.c.bf16 %v832, %v830
  %v1001 = vpack.c.bf16 %v833, %v831
  %v1002 = vpack.c.bf16 %v836, %v834
  %v1003 = vpack.c.bf16 %v837, %v835
  %v1004 = vpack.c.bf16 %v840, %v838
  %v1005 = vpack.c.bf16 %v841, %v839
  %v1006 = vpack.c.bf16 %v844, %v842
  %v1007 = vpack.c.bf16 %v845, %v843
  %v1008 = vpack.c.bf16 %v848, %v846
  %v1009 = vpack.c.bf16 %v849, %v847
  %v1010 = vpack.c.bf16 %v852, %v850
  %v1011 = vpack.c.bf16 %v853, %v851
  %v1012 = vpack.c.bf16 %v856, %v854
  %v1013 = vpack.c.bf16 %v857, %v855
  %v1014 = vpack.c.bf16 %v860, %v858
  %v1015 = vpack.c.bf16 %v861, %v859
  %v1016 = vpack.c.bf16 %v864, %v862
  %v1017 = vpack.c.bf16 %v865, %v863
  %v1018 = vpack.c.bf16 %v868, %v866
  %v1019 = vpack.c.bf16 %v869, %v867
  %v1020 = vpack.c.bf16 %v872, %v870
  %v1021 = vpack.c.bf16 %v873, %v871
  %v1022 = vpack.c.bf16 %v876, %v874
  %v1023 = vpack.c.bf16 %v877, %v875
  %v1024 = vpack.c.bf16 %v880, %v878
  %v1025 = vpack.c.bf16 %v881, %v879
  %v1026 = vpack.c.bf16 %v884, %v882
  %v1027 = vpack.c.bf16 %v885, %v883
  %v1028 = vpack.c.bf16 %v888, %v886
  %v1029 = vpack.c.bf16 %v889, %v887
  %v1030 = vpack.c.bf16 %v892, %v890
  %v1031 = vpack.c.bf16 %v893, %v891
  %v1032 = vpack.c.bf16 %v896, %v894
  %v1033 = vpack.c.bf16 %v897, %v895
  %v1034 = vpack.c.bf16 %v900, %v898
  %v1035 = vpack.c.bf16 %v901, %v899
  %v1036 = vpack.c.bf16 %v904, %v902
  %v1037 = vpack.c.bf16 %v905, %v903
  %vm1038 = vcmask 261120
  %v1040 = vsel %vm1038, %v551, 0
  %v1043 = vsel %vm1038, %v560, 0
  %v1046 = vsel %vm1038, %v569, 0
  %v1049 = vsel %vm1038, %v578, 0
  %v1052 = vsel %vm1038, %v587, 0
  %v1055 = vsel %vm1038, %v596, 0
  %v1058 = vsel %vm1038, %v605, 0
  %v1061 = vsel %vm1038, %v614, 0
  %v1064 = vsel %vm1038, %v623, 0
  %v1067 = vsel %vm1038, %v632, 0
  %v1070 = vsel %vm1038, %v641, 0
  %1072 = vmatpush.bf16.msra.mxu0 %v920
  %1073 = vmatpush.bf16.msra.mxu0 %v918
  %1074 = vmatpush.bf16.msra.mxu0 %v916
  %1075 = vmatpush.bf16.msra.mxu0 %v914
  %1076 = vmatpush.bf16.msra.mxu0 %v912
  %1077 = vmatpush.bf16.msra.mxu0 %v910
  %1078 = vmatpush.bf16.msra.mxu0 %v908
  %1079 = vmatpush.bf16.msra.mxu0 %v906
  %1080 = vmatmul.bf16.gmra.mxu0 %v543
  %v1081 = vpop.f32.mrf.mxu0
  %v1082 = vadd.f32 0.0, %v1081
  %v1083 = vpop.f32.mrf.mxu0
  %v1084 = vadd.f32 0.0, %v1083
  %1085 = vmatmul.bf16.gmra.mxu0 %v552
  %v1086 = vpop.f32.mrf.mxu0
  %v1087 = vadd.f32 0.0, %v1086
  %v1088 = vpop.f32.mrf.mxu0
  %v1089 = vadd.f32 0.0, %v1088
  %1090 = vmatmul.bf16.gmra.mxu0 %v561
  %v1091 = vpop.f32.mrf.mxu0
  %v1092 = vadd.f32 0.0, %v1091
  %v1093 = vpop.f32.mrf.mxu0
  %v1094 = vadd.f32 0.0, %v1093
  %1095 = vmatmul.bf16.gmra.mxu0 %v570
  %v1096 = vpop.f32.mrf.mxu0
  %v1097 = vadd.f32 0.0, %v1096
  %v1098 = vpop.f32.mrf.mxu0
  %v1099 = vadd.f32 0.0, %v1098
  %1100 = vmatmul.bf16.gmra.mxu0 %v579
  %v1101 = vpop.f32.mrf.mxu0
  %v1102 = vadd.f32 0.0, %v1101
  %v1103 = vpop.f32.mrf.mxu0
  %v1104 = vadd.f32 0.0, %v1103
  %1105 = vmatmul.bf16.gmra.mxu0 %v588
  %v1106 = vpop.f32.mrf.mxu0
  %v1107 = vadd.f32 0.0, %v1106
  %v1108 = vpop.f32.mrf.mxu0
  %v1109 = vadd.f32 0.0, %v1108
  %1110 = vmatmul.bf16.gmra.mxu0 %v597
  %v1111 = vpop.f32.mrf.mxu0
  %v1112 = vadd.f32 0.0, %v1111
  %v1113 = vpop.f32.mrf.mxu0
  %v1114 = vadd.f32 0.0, %v1113
  %1115 = vmatmul.bf16.gmra.mxu0 %v606
  %v1116 = vpop.f32.mrf.mxu0
  %v1117 = vadd.f32 0.0, %v1116
  %v1118 = vpop.f32.mrf.mxu0
  %v1119 = vadd.f32 0.0, %v1118
  %1120 = vmatmul.bf16.gmra.mxu0 %v615
  %v1121 = vpop.f32.mrf.mxu0
  %v1122 = vadd.f32 0.0, %v1121
  %v1123 = vpop.f32.mrf.mxu0
  %v1124 = vadd.f32 0.0, %v1123
  %1125 = vmatmul.bf16.gmra.mxu0 %v624
  %v1126 = vpop.f32.mrf.mxu0
  %v1127 = vadd.f32 0.0, %v1126
  %v1128 = vpop.f32.mrf.mxu0
  %v1129 = vadd.f32 0.0, %v1128
  %1130 = vmatmul.bf16.gmra.mxu0 %v633
  %v1131 = vpop.f32.mrf.mxu0
  %v1132 = vadd.f32 0.0, %v1131
  %v1133 = vpop.f32.mrf.mxu0
  %v1134 = vadd.f32 0.0, %v1133
  %1135 = vdwg.mxu0
  %1136 = vmatpush.bf16.msra.mxu0 %v936
  %1137 = vmatpush.bf16.msra.mxu0 %v934
  %1138 = vmatpush.bf16.msra.mxu0 %v932
  %1139 = vmatpush.bf16.msra.mxu0 %v930
  %1140 = vmatpush.bf16.msra.mxu0 %v928
  %1141 = vmatpush.bf16.msra.mxu0 %v926
  %1142 = vmatpush.bf16.msra.mxu0 %v924
  %1143 = vmatpush.bf16.msra.mxu0 %v922
  %1144 = vmatmul.bf16.gmra.mxu0 %v544
  %v1145 = vpop.f32.mrf.mxu0
  %v1146 = vadd.f32 %v1082, %v1145
  %v1147 = vpop.f32.mrf.mxu0
  %v1148 = vadd.f32 %v1084, %v1147
  %1149 = vmatmul.bf16.gmra.mxu0 %v553
  %v1150 = vpop.f32.mrf.mxu0
  %v1151 = vadd.f32 %v1087, %v1150
  %v1152 = vpop.f32.mrf.mxu0
  %v1153 = vadd.f32 %v1089, %v1152
  %1154 = vmatmul.bf16.gmra.mxu0 %v562
  %v1155 = vpop.f32.mrf.mxu0
  %v1156 = vadd.f32 %v1092, %v1155
  %v1157 = vpop.f32.mrf.mxu0
  %v1158 = vadd.f32 %v1094, %v1157
  %1159 = vmatmul.bf16.gmra.mxu0 %v571
  %v1160 = vpop.f32.mrf.mxu0
  %v1161 = vadd.f32 %v1097, %v1160
  %v1162 = vpop.f32.mrf.mxu0
  %v1163 = vadd.f32 %v1099, %v1162
  %1164 = vmatmul.bf16.gmra.mxu0 %v580
  %v1165 = vpop.f32.mrf.mxu0
  %v1166 = vadd.f32 %v1102, %v1165
  %v1167 = vpop.f32.mrf.mxu0
  %v1168 = vadd.f32 %v1104, %v1167
  %1169 = vmatmul.bf16.gmra.mxu0 %v589
  %v1170 = vpop.f32.mrf.mxu0
  %v1171 = vadd.f32 %v1107, %v1170
  %v1172 = vpop.f32.mrf.mxu0
  %v1173 = vadd.f32 %v1109, %v1172
  %1174 = vmatmul.bf16.gmra.mxu0 %v598
  %v1175 = vpop.f32.mrf.mxu0
  %v1176 = vadd.f32 %v1112, %v1175
  %v1177 = vpop.f32.mrf.mxu0
  %v1178 = vadd.f32 %v1114, %v1177
  %1179 = vmatmul.bf16.gmra.mxu0 %v607
  %v1180 = vpop.f32.mrf.mxu0
  %v1181 = vadd.f32 %v1117, %v1180
  %v1182 = vpop.f32.mrf.mxu0
  %v1183 = vadd.f32 %v1119, %v1182
  %1184 = vmatmul.bf16.gmra.mxu0 %v616
  %v1185 = vpop.f32.mrf.mxu0
  %v1186 = vadd.f32 %v1122, %v1185
  %v1187 = vpop.f32.mrf.mxu0
  %v1188 = vadd.f32 %v1124, %v1187
  %1189 = vmatmul.bf16.gmra.mxu0 %v625
  %v1190 = vpop.f32.mrf.mxu0
  %v1191 = vadd.f32 %v1127, %v1190
  %v1192 = vpop.f32.mrf.mxu0
  %v1193 = vadd.f32 %v1129, %v1192
  %1194 = vmatmul.bf16.gmra.mxu0 %v634
  %v1195 = vpop.f32.mrf.mxu0
  %v1196 = vadd.f32 %v1132, %v1195
  %v1197 = vpop.f32.mrf.mxu0
  %v1198 = vadd.f32 %v1134, %v1197
  %1199 = vdwg.mxu0
  %1200 = vmatpush.bf16.msra.mxu0 %v952
  %1201 = vmatpush.bf16.msra.mxu0 %v950
  %1202 = vmatpush.bf16.msra.mxu0 %v948
  %1203 = vmatpush.bf16.msra.mxu0 %v946
  %1204 = vmatpush.bf16.msra.mxu0 %v944
  %1205 = vmatpush.bf16.msra.mxu0 %v942
  %1206 = vmatpush.bf16.msra.mxu0 %v940
  %1207 = vmatpush.bf16.msra.mxu0 %v938
  %1208 = vmatmul.bf16.gmra.mxu0 %v545
  %v1209 = vpop.f32.mrf.mxu0
  %v1210 = vadd.f32 %v1146, %v1209
  %v1211 = vpop.f32.mrf.mxu0
  %v1212 = vadd.f32 %v1148, %v1211
  %1213 = vmatmul.bf16.gmra.mxu0 %v554
  %v1214 = vpop.f32.mrf.mxu0
  %v1215 = vadd.f32 %v1151, %v1214
  %v1216 = vpop.f32.mrf.mxu0
  %v1217 = vadd.f32 %v1153, %v1216
  %1218 = vmatmul.bf16.gmra.mxu0 %v563
  %v1219 = vpop.f32.mrf.mxu0
  %v1220 = vadd.f32 %v1156, %v1219
  %v1221 = vpop.f32.mrf.mxu0
  %v1222 = vadd.f32 %v1158, %v1221
  %1223 = vmatmul.bf16.gmra.mxu0 %v572
  %v1224 = vpop.f32.mrf.mxu0
  %v1225 = vadd.f32 %v1161, %v1224
  %v1226 = vpop.f32.mrf.mxu0
  %v1227 = vadd.f32 %v1163, %v1226
  %1228 = vmatmul.bf16.gmra.mxu0 %v581
  %v1229 = vpop.f32.mrf.mxu0
  %v1230 = vadd.f32 %v1166, %v1229
  %v1231 = vpop.f32.mrf.mxu0
  %v1232 = vadd.f32 %v1168, %v1231
  %1233 = vmatmul.bf16.gmra.mxu0 %v590
  %v1234 = vpop.f32.mrf.mxu0
  %v1235 = vadd.f32 %v1171, %v1234
  %v1236 = vpop.f32.mrf.mxu0
  %v1237 = vadd.f32 %v1173, %v1236
  %1238 = vmatmul.bf16.gmra.mxu0 %v599
  %v1239 = vpop.f32.mrf.mxu0
  %v1240 = vadd.f32 %v1176, %v1239
  %v1241 = vpop.f32.mrf.mxu0
  %v1242 = vadd.f32 %v1178, %v1241
  %1243 = vmatmul.bf16.gmra.mxu0 %v608
  %v1244 = vpop.f32.mrf.mxu0
  %v1245 = vadd.f32 %v1181, %v1244
  %v1246 = vpop.f32.mrf.mxu0
  %v1247 = vadd.f32 %v1183, %v1246
  %1248 = vmatmul.bf16.gmra.mxu0 %v617
  %v1249 = vpop.f32.mrf.mxu0
  %v1250 = vadd.f32 %v1186, %v1249
  %v1251 = vpop.f32.mrf.mxu0
  %v1252 = vadd.f32 %v1188, %v1251
  %1253 = vmatmul.bf16.gmra.mxu0 %v626
  %v1254 = vpop.f32.mrf.mxu0
  %v1255 = vadd.f32 %v1191, %v1254
  %v1256 = vpop.f32.mrf.mxu0
  %v1257 = vadd.f32 %v1193, %v1256
  %1258 = vmatmul.bf16.gmra.mxu0 %v635
  %v1259 = vpop.f32.mrf.mxu0
  %v1260 = vadd.f32 %v1196, %v1259
  %v1261 = vpop.f32.mrf.mxu0
  %v1262 = vadd.f32 %v1198, %v1261
  %1263 = vdwg.mxu0
  %1264 = vmatpush.bf16.msra.mxu0 %v968
  %1265 = vmatpush.bf16.msra.mxu0 %v966
  %1266 = vmatpush.bf16.msra.mxu0 %v964
  %1267 = vmatpush.bf16.msra.mxu0 %v962
  %1268 = vmatpush.bf16.msra.mxu0 %v960
  %1269 = vmatpush.bf16.msra.mxu0 %v958
  %1270 = vmatpush.bf16.msra.mxu0 %v956
  %1271 = vmatpush.bf16.msra.mxu0 %v954
  %1272 = vmatmul.bf16.gmra.mxu0 %v546
  %v1273 = vpop.f32.mrf.mxu0
  %v1274 = vadd.f32 %v1210, %v1273
  %v1275 = vpop.f32.mrf.mxu0
  %v1276 = vadd.f32 %v1212, %v1275
  %1277 = vmatmul.bf16.gmra.mxu0 %v555
  %v1278 = vpop.f32.mrf.mxu0
  %v1279 = vadd.f32 %v1215, %v1278
  %v1280 = vpop.f32.mrf.mxu0
  %v1281 = vadd.f32 %v1217, %v1280
  %1282 = vmatmul.bf16.gmra.mxu0 %v564
  %v1283 = vpop.f32.mrf.mxu0
  %v1284 = vadd.f32 %v1220, %v1283
  %v1285 = vpop.f32.mrf.mxu0
  %v1286 = vadd.f32 %v1222, %v1285
  %1287 = vmatmul.bf16.gmra.mxu0 %v573
  %v1288 = vpop.f32.mrf.mxu0
  %v1289 = vadd.f32 %v1225, %v1288
  %v1290 = vpop.f32.mrf.mxu0
  %v1291 = vadd.f32 %v1227, %v1290
  %1292 = vmatmul.bf16.gmra.mxu0 %v582
  %v1293 = vpop.f32.mrf.mxu0
  %v1294 = vadd.f32 %v1230, %v1293
  %v1295 = vpop.f32.mrf.mxu0
  %v1296 = vadd.f32 %v1232, %v1295
  %1297 = vmatmul.bf16.gmra.mxu0 %v591
  %v1298 = vpop.f32.mrf.mxu0
  %v1299 = vadd.f32 %v1235, %v1298
  %v1300 = vpop.f32.mrf.mxu0
  %v1301 = vadd.f32 %v1237, %v1300
  %1302 = vmatmul.bf16.gmra.mxu0 %v600
  %v1303 = vpop.f32.mrf.mxu0
  %v1304 = vadd.f32 %v1240, %v1303
  %v1305 = vpop.f32.mrf.mxu0
  %v1306 = vadd.f32 %v1242, %v1305
  %1307 = vmatmul.bf16.gmra.mxu0 %v609
  %v1308 = vpop.f32.mrf.mxu0
  %v1309 = vadd.f32 %v1245, %v1308
  %v1310 = vpop.f32.mrf.mxu0
  %v1311 = vadd.f32 %v1247, %v1310
  %1312 = vmatmul.bf16.gmra.mxu0 %v618
  %v1313 = vpop.f32.mrf.mxu0
  %v1314 = vadd.f32 %v1250, %v1313
  %v1315 = vpop.f32.mrf.mxu0
  %v1316 = vadd.f32 %v1252, %v1315
  %1317 = vmatmul.bf16.gmra.mxu0 %v627
  %v1318 = vpop.f32.mrf.mxu0
  %v1319 = vadd.f32 %v1255, %v1318
  %v1320 = vpop.f32.mrf.mxu0
  %v1321 = vadd.f32 %v1257, %v1320
  %1322 = vmatmul.bf16.gmra.mxu0 %v636
  %v1323 = vpop.f32.mrf.mxu0
  %v1324 = vadd.f32 %v1260, %v1323
  %v1325 = vpop.f32.mrf.mxu0
  %v1326 = vadd.f32 %v1262, %v1325
  %1327 = vdwg.mxu0
  %1328 = vmatpush.bf16.msra.mxu0 %v984
  %1329 = vmatpush.bf16.msra.mxu0 %v982
  %1330 = vmatpush.bf16.msra.mxu0 %v980
  %1331 = vmatpush.bf16.msra.mxu0 %v978
  %1332 = vmatpush.bf16.msra.mxu0 %v976
  %1333 = vmatpush.bf16.msra.mxu0 %v974
  %1334 = vmatpush.bf16.msra.mxu0 %v972
  %1335 = vmatpush.bf16.msra.mxu0 %v970
  %1336 = vmatmul.bf16.gmra.mxu0 %v547
  %v1337 = vpop.f32.mrf.mxu0
  %v1338 = vadd.f32 %v1274, %v1337
  %v1339 = vpop.f32.mrf.mxu0
  %v1340 = vadd.f32 %v1276, %v1339
  %1341 = vmatmul.bf16.gmra.mxu0 %v556
  %v1342 = vpop.f32.mrf.mxu0
  %v1343 = vadd.f32 %v1279, %v1342
  %v1344 = vpop.f32.mrf.mxu0
  %v1345 = vadd.f32 %v1281, %v1344
  %1346 = vmatmul.bf16.gmra.mxu0 %v565
  %v1347 = vpop.f32.mrf.mxu0
  %v1348 = vadd.f32 %v1284, %v1347
  %v1349 = vpop.f32.mrf.mxu0
  %v1350 = vadd.f32 %v1286, %v1349
  %1351 = vmatmul.bf16.gmra.mxu0 %v574
  %v1352 = vpop.f32.mrf.mxu0
  %v1353 = vadd.f32 %v1289, %v1352
  %v1354 = vpop.f32.mrf.mxu0
  %v1355 = vadd.f32 %v1291, %v1354
  %1356 = vmatmul.bf16.gmra.mxu0 %v583
  %v1357 = vpop.f32.mrf.mxu0
  %v1358 = vadd.f32 %v1294, %v1357
  %v1359 = vpop.f32.mrf.mxu0
  %v1360 = vadd.f32 %v1296, %v1359
  %1361 = vmatmul.bf16.gmra.mxu0 %v592
  %v1362 = vpop.f32.mrf.mxu0
  %v1363 = vadd.f32 %v1299, %v1362
  %v1364 = vpop.f32.mrf.mxu0
  %v1365 = vadd.f32 %v1301, %v1364
  %1366 = vmatmul.bf16.gmra.mxu0 %v601
  %v1367 = vpop.f32.mrf.mxu0
  %v1368 = vadd.f32 %v1304, %v1367
  %v1369 = vpop.f32.mrf.mxu0
  %v1370 = vadd.f32 %v1306, %v1369
  %1371 = vmatmul.bf16.gmra.mxu0 %v610
  %v1372 = vpop.f32.mrf.mxu0
  %v1373 = vadd.f32 %v1309, %v1372
  %v1374 = vpop.f32.mrf.mxu0
  %v1375 = vadd.f32 %v1311, %v1374
  %1376 = vmatmul.bf16.gmra.mxu0 %v619
  %v1377 = vpop.f32.mrf.mxu0
  %v1378 = vadd.f32 %v1314, %v1377
  %v1379 = vpop.f32.mrf.mxu0
  %v1380 = vadd.f32 %v1316, %v1379
  %1381 = vmatmul.bf16.gmra.mxu0 %v628
  %v1382 = vpop.f32.mrf.mxu0
  %v1383 = vadd.f32 %v1319, %v1382
  %v1384 = vpop.f32.mrf.mxu0
  %v1385 = vadd.f32 %v1321, %v1384
  %1386 = vmatmul.bf16.gmra.mxu0 %v637
  %v1387 = vpop.f32.mrf.mxu0
  %v1388 = vadd.f32 %v1324, %v1387
  %v1389 = vpop.f32.mrf.mxu0
  %v1390 = vadd.f32 %v1326, %v1389
  %1391 = vdwg.mxu0
  %1392 = vmatpush.bf16.msra.mxu0 %v1000
  %1393 = vmatpush.bf16.msra.mxu0 %v998
  %1394 = vmatpush.bf16.msra.mxu0 %v996
  %1395 = vmatpush.bf16.msra.mxu0 %v994
  %1396 = vmatpush.bf16.msra.mxu0 %v992
  %1397 = vmatpush.bf16.msra.mxu0 %v990
  %1398 = vmatpush.bf16.msra.mxu0 %v988
  %1399 = vmatpush.bf16.msra.mxu0 %v986
  %1400 = vmatmul.bf16.gmra.mxu0 %v548
  %v1401 = vpop.f32.mrf.mxu0
  %v1402 = vadd.f32 %v1338, %v1401
  %v1403 = vpop.f32.mrf.mxu0
  %v1404 = vadd.f32 %v1340, %v1403
  %1405 = vmatmul.bf16.gmra.mxu0 %v557
  %v1406 = vpop.f32.mrf.mxu0
  %v1407 = vadd.f32 %v1343, %v1406
  %v1408 = vpop.f32.mrf.mxu0
  %v1409 = vadd.f32 %v1345, %v1408
  %1410 = vmatmul.bf16.gmra.mxu0 %v566
  %v1411 = vpop.f32.mrf.mxu0
  %v1412 = vadd.f32 %v1348, %v1411
  %v1413 = vpop.f32.mrf.mxu0
  %v1414 = vadd.f32 %v1350, %v1413
  %1415 = vmatmul.bf16.gmra.mxu0 %v575
  %v1416 = vpop.f32.mrf.mxu0
  %v1417 = vadd.f32 %v1353, %v1416
  %v1418 = vpop.f32.mrf.mxu0
  %v1419 = vadd.f32 %v1355, %v1418
  %1420 = vmatmul.bf16.gmra.mxu0 %v584
  %v1421 = vpop.f32.mrf.mxu0
  %v1422 = vadd.f32 %v1358, %v1421
  %v1423 = vpop.f32.mrf.mxu0
  %v1424 = vadd.f32 %v1360, %v1423
  %1425 = vmatmul.bf16.gmra.mxu0 %v593
  %v1426 = vpop.f32.mrf.mxu0
  %v1427 = vadd.f32 %v1363, %v1426
  %v1428 = vpop.f32.mrf.mxu0
  %v1429 = vadd.f32 %v1365, %v1428
  %1430 = vmatmul.bf16.gmra.mxu0 %v602
  %v1431 = vpop.f32.mrf.mxu0
  %v1432 = vadd.f32 %v1368, %v1431
  %v1433 = vpop.f32.mrf.mxu0
  %v1434 = vadd.f32 %v1370, %v1433
  %1435 = vmatmul.bf16.gmra.mxu0 %v611
  %v1436 = vpop.f32.mrf.mxu0
  %v1437 = vadd.f32 %v1373, %v1436
  %v1438 = vpop.f32.mrf.mxu0
  %v1439 = vadd.f32 %v1375, %v1438
  %1440 = vmatmul.bf16.gmra.mxu0 %v620
  %v1441 = vpop.f32.mrf.mxu0
  %v1442 = vadd.f32 %v1378, %v1441
  %v1443 = vpop.f32.mrf.mxu0
  %v1444 = vadd.f32 %v1380, %v1443
  %1445 = vmatmul.bf16.gmra.mxu0 %v629
  %v1446 = vpop.f32.mrf.mxu0
  %v1447 = vadd.f32 %v1383, %v1446
  %v1448 = vpop.f32.mrf.mxu0
  %v1449 = vadd.f32 %v1385, %v1448
  %1450 = vmatmul.bf16.gmra.mxu0 %v638
  %v1451 = vpop.f32.mrf.mxu0
  %v1452 = vadd.f32 %v1388, %v1451
  %v1453 = vpop.f32.mrf.mxu0
  %v1454 = vadd.f32 %v1390, %v1453
  %1455 = vdwg.mxu0
  %1456 = vmatpush.bf16.msra.mxu0 %v1016
  %1457 = vmatpush.bf16.msra.mxu0 %v1014
  %1458 = vmatpush.bf16.msra.mxu0 %v1012
  %1459 = vmatpush.bf16.msra.mxu0 %v1010
  %1460 = vmatpush.bf16.msra.mxu0 %v1008
  %1461 = vmatpush.bf16.msra.mxu0 %v1006
  %1462 = vmatpush.bf16.msra.mxu0 %v1004
  %1463 = vmatpush.bf16.msra.mxu0 %v1002
  %1464 = vmatmul.bf16.gmra.mxu0 %v549
  %v1465 = vpop.f32.mrf.mxu0
  %v1466 = vadd.f32 %v1402, %v1465
  %v1467 = vpop.f32.mrf.mxu0
  %v1468 = vadd.f32 %v1404, %v1467
  %1469 = vmatmul.bf16.gmra.mxu0 %v558
  %v1470 = vpop.f32.mrf.mxu0
  %v1471 = vadd.f32 %v1407, %v1470
  %v1472 = vpop.f32.mrf.mxu0
  %v1473 = vadd.f32 %v1409, %v1472
  %1474 = vmatmul.bf16.gmra.mxu0 %v567
  %v1475 = vpop.f32.mrf.mxu0
  %v1476 = vadd.f32 %v1412, %v1475
  %v1477 = vpop.f32.mrf.mxu0
  %v1478 = vadd.f32 %v1414, %v1477
  %1479 = vmatmul.bf16.gmra.mxu0 %v576
  %v1480 = vpop.f32.mrf.mxu0
  %v1481 = vadd.f32 %v1417, %v1480
  %v1482 = vpop.f32.mrf.mxu0
  %v1483 = vadd.f32 %v1419, %v1482
  %1484 = vmatmul.bf16.gmra.mxu0 %v585
  %v1485 = vpop.f32.mrf.mxu0
  %v1486 = vadd.f32 %v1422, %v1485
  %v1487 = vpop.f32.mrf.mxu0
  %v1488 = vadd.f32 %v1424, %v1487
  %1489 = vmatmul.bf16.gmra.mxu0 %v594
  %v1490 = vpop.f32.mrf.mxu0
  %v1491 = vadd.f32 %v1427, %v1490
  %v1492 = vpop.f32.mrf.mxu0
  %v1493 = vadd.f32 %v1429, %v1492
  %1494 = vmatmul.bf16.gmra.mxu0 %v603
  %v1495 = vpop.f32.mrf.mxu0
  %v1496 = vadd.f32 %v1432, %v1495
  %v1497 = vpop.f32.mrf.mxu0
  %v1498 = vadd.f32 %v1434, %v1497
  %1499 = vmatmul.bf16.gmra.mxu0 %v612
  %v1500 = vpop.f32.mrf.mxu0
  %v1501 = vadd.f32 %v1437, %v1500
  %v1502 = vpop.f32.mrf.mxu0
  %v1503 = vadd.f32 %v1439, %v1502
  %1504 = vmatmul.bf16.gmra.mxu0 %v621
  %v1505 = vpop.f32.mrf.mxu0
  %v1506 = vadd.f32 %v1442, %v1505
  %v1507 = vpop.f32.mrf.mxu0
  %v1508 = vadd.f32 %v1444, %v1507
  %1509 = vmatmul.bf16.gmra.mxu0 %v630
  %v1510 = vpop.f32.mrf.mxu0
  %v1511 = vadd.f32 %v1447, %v1510
  %v1512 = vpop.f32.mrf.mxu0
  %v1513 = vadd.f32 %v1449, %v1512
  %1514 = vmatmul.bf16.gmra.mxu0 %v639
  %v1515 = vpop.f32.mrf.mxu0
  %v1516 = vadd.f32 %v1452, %v1515
  %v1517 = vpop.f32.mrf.mxu0
  %v1518 = vadd.f32 %v1454, %v1517
  %1519 = vdwg.mxu0
  %1520 = vmatpush.bf16.msra.mxu0 %v1032
  %1521 = vmatpush.bf16.msra.mxu0 %v1030
  %1522 = vmatpush.bf16.msra.mxu0 %v1028
  %1523 = vmatpush.bf16.msra.mxu0 %v1026
  %1524 = vmatpush.bf16.msra.mxu0 %v1024
  %1525 = vmatpush.bf16.msra.mxu0 %v1022
  %1526 = vmatpush.bf16.msra.mxu0 %v1020
  %1527 = vmatpush.bf16.msra.mxu0 %v1018
  %1528 = vmatmul.bf16.gmra.mxu0 %v550
  %v1529 = vpop.f32.mrf.mxu0
  %v1530 = vadd.f32 %v1466, %v1529
  %v1531 = vpop.f32.mrf.mxu0
  %v1532 = vadd.f32 %v1468, %v1531
  %1533 = vmatmul.bf16.gmra.mxu0 %v559
  %v1534 = vpop.f32.mrf.mxu0
  %v1535 = vadd.f32 %v1471, %v1534
  %v1536 = vpop.f32.mrf.mxu0
  %v1537 = vadd.f32 %v1473, %v1536
  %1538 = vmatmul.bf16.gmra.mxu0 %v568
  %v1539 = vpop.f32.mrf.mxu0
  %v1540 = vadd.f32 %v1476, %v1539
  %v1541 = vpop.f32.mrf.mxu0
  %v1542 = vadd.f32 %v1478, %v1541
  %1543 = vmatmul.bf16.gmra.mxu0 %v577
  %v1544 = vpop.f32.mrf.mxu0
  %v1545 = vadd.f32 %v1481, %v1544
  %v1546 = vpop.f32.mrf.mxu0
  %v1547 = vadd.f32 %v1483, %v1546
  %1548 = vmatmul.bf16.gmra.mxu0 %v586
  %v1549 = vpop.f32.mrf.mxu0
  %v1550 = vadd.f32 %v1486, %v1549
  %v1551 = vpop.f32.mrf.mxu0
  %v1552 = vadd.f32 %v1488, %v1551
  %1553 = vmatmul.bf16.gmra.mxu0 %v595
  %v1554 = vpop.f32.mrf.mxu0
  %v1555 = vadd.f32 %v1491, %v1554
  %v1556 = vpop.f32.mrf.mxu0
  %v1557 = vadd.f32 %v1493, %v1556
  %1558 = vmatmul.bf16.gmra.mxu0 %v604
  %v1559 = vpop.f32.mrf.mxu0
  %v1560 = vadd.f32 %v1496, %v1559
  %v1561 = vpop.f32.mrf.mxu0
  %v1562 = vadd.f32 %v1498, %v1561
  %1563 = vmatmul.bf16.gmra.mxu0 %v613
  %v1564 = vpop.f32.mrf.mxu0
  %v1565 = vadd.f32 %v1501, %v1564
  %v1566 = vpop.f32.mrf.mxu0
  %v1567 = vadd.f32 %v1503, %v1566
  %1568 = vmatmul.bf16.gmra.mxu0 %v622
  %v1569 = vpop.f32.mrf.mxu0
  %v1570 = vadd.f32 %v1506, %v1569
  %v1571 = vpop.f32.mrf.mxu0
  %v1572 = vadd.f32 %v1508, %v1571
  %1573 = vmatmul.bf16.gmra.mxu0 %v631
  %v1574 = vpop.f32.mrf.mxu0
  %v1575 = vadd.f32 %v1511, %v1574
  %v1576 = vpop.f32.mrf.mxu0
  %v1577 = vadd.f32 %v1513, %v1576
  %1578 = vmatmul.bf16.gmra.mxu0 %v640
  %v1579 = vpop.f32.mrf.mxu0
  %v1580 = vadd.f32 %v1516, %v1579
  %v1581 = vpop.f32.mrf.mxu0
  %v1582 = vadd.f32 %v1518, %v1581
  %1583 = vdwg.mxu0
  %1584 = vmatpush.bf16.msra.mxu0 0
  %1585 = vmatpush.bf16.msra.mxu0 0
  %1586 = vmatpush.bf16.msra.mxu0 0
  %1587 = vmatpush.bf16.msra.mxu0 0
  %1588 = vmatpush.bf16.msra.mxu0 0
  %1589 = vmatpush.bf16.msra.mxu0 0
  %1590 = vmatpush.bf16.msra.mxu0 %v1036
  %1591 = vmatpush.bf16.msra.mxu0 %v1034
  %1592 = vmatmul.bf16.gmra.mxu0 %v1040
  %v1593 = vpop.f32.mrf.mxu0
  %v1594 = vadd.f32 %v1530, %v1593
  %v1595 = vpop.f32.mrf.mxu0
  %v1596 = vadd.f32 %v1532, %v1595
  %1597 = vmatmul.bf16.gmra.mxu0 %v1043
  %v1598 = vpop.f32.mrf.mxu0
  %v1599 = vadd.f32 %v1535, %v1598
  %v1600 = vpop.f32.mrf.mxu0
  %v1601 = vadd.f32 %v1537, %v1600
  %1602 = vmatmul.bf16.gmra.mxu0 %v1046
  %v1603 = vpop.f32.mrf.mxu0
  %v1604 = vadd.f32 %v1540, %v1603
  %v1605 = vpop.f32.mrf.mxu0
  %v1606 = vadd.f32 %v1542, %v1605
  %1607 = vmatmul.bf16.gmra.mxu0 %v1049
  %v1608 = vpop.f32.mrf.mxu0
  %v1609 = vadd.f32 %v1545, %v1608
  %v1610 = vpop.f32.mrf.mxu0
  %v1611 = vadd.f32 %v1547, %v1610
  %1612 = vmatmul.bf16.gmra.mxu0 %v1052
  %v1613 = vpop.f32.mrf.mxu0
  %v1614 = vadd.f32 %v1550, %v1613
  %v1615 = vpop.f32.mrf.mxu0
  %v1616 = vadd.f32 %v1552, %v1615
  %1617 = vmatmul.bf16.gmra.mxu0 %v1055
  %v1618 = vpop.f32.mrf.mxu0
  %v1619 = vadd.f32 %v1555, %v1618
  %v1620 = vpop.f32.mrf.mxu0
  %v1621 = vadd.f32 %v1557, %v1620
  %1622 = vmatmul.bf16.gmra.mxu0 %v1058
  %v1623 = vpop.f32.mrf.mxu0
  %v1624 = vadd.f32 %v1560, %v1623
  %v1625 = vpop.f32.mrf.mxu0
  %v1626 = vadd.f32 %v1562, %v1625
  %1627 = vmatmul.bf16.gmra.mxu0 %v1061
  %v1628 = vpop.f32.mrf.mxu0
  %v1629 = vadd.f32 %v1565, %v1628
  %v1630 = vpop.f32.mrf.mxu0
  %v1631 = vadd.f32 %v1567, %v1630
  %1632 = vmatmul.bf16.gmra.mxu0 %v1064
  %v1633 = vpop.f32.mrf.mxu0
  %v1634 = vadd.f32 %v1570, %v1633
  %v1635 = vpop.f32.mrf.mxu0
  %v1636 = vadd.f32 %v1572, %v1635
  %1637 = vmatmul.bf16.gmra.mxu0 %v1067
  %v1638 = vpop.f32.mrf.mxu0
  %v1639 = vadd.f32 %v1575, %v1638
  %v1640 = vpop.f32.mrf.mxu0
  %v1641 = vadd.f32 %v1577, %v1640
  %1642 = vmatmul.bf16.gmra.mxu0 %v1070
  %v1643 = vpop.f32.mrf.mxu0
  %v1644 = vadd.f32 %v1580, %v1643
  %v1645 = vpop.f32.mrf.mxu0
  %v1646 = vadd.f32 %v1582, %v1645
  %1647 = vdwg.mxu0
  %1648 = vmatpush.bf16.msra.mxu0 %v921
  %1649 = vmatpush.bf16.msra.mxu0 %v919
  %1650 = vmatpush.bf16.msra.mxu0 %v917
  %1651 = vmatpush.bf16.msra.mxu0 %v915
  %1652 = vmatpush.bf16.msra.mxu0 %v913
  %1653 = vmatpush.bf16.msra.mxu0 %v911
  %1654 = vmatpush.bf16.msra.mxu0 %v909
  %1655 = vmatpush.bf16.msra.mxu0 %v907
  %1656 = vmatmul.bf16.gmra.mxu0 %v543
  %v1657 = vpop.f32.mrf.mxu0
  %v1658 = vadd.f32 0.0, %v1657
  %v1659 = vpop.f32.mrf.mxu0
  %v1660 = vadd.f32 0.0, %v1659
  %1661 = vmatmul.bf16.gmra.mxu0 %v552
  %v1662 = vpop.f32.mrf.mxu0
  %v1663 = vadd.f32 0.0, %v1662
  %v1664 = vpop.f32.mrf.mxu0
  %v1665 = vadd.f32 0.0, %v1664
  %1666 = vmatmul.bf16.gmra.mxu0 %v561
  %v1667 = vpop.f32.mrf.mxu0
  %v1668 = vadd.f32 0.0, %v1667
  %v1669 = vpop.f32.mrf.mxu0
  %v1670 = vadd.f32 0.0, %v1669
  %1671 = vmatmul.bf16.gmra.mxu0 %v570
  %v1672 = vpop.f32.mrf.mxu0
  %v1673 = vadd.f32 0.0, %v1672
  %v1674 = vpop.f32.mrf.mxu0
  %v1675 = vadd.f32 0.0, %v1674
  %1676 = vmatmul.bf16.gmra.mxu0 %v579
  %v1677 = vpop.f32.mrf.mxu0
  %v1678 = vadd.f32 0.0, %v1677
  %v1679 = vpop.f32.mrf.mxu0
  %v1680 = vadd.f32 0.0, %v1679
  %1681 = vmatmul.bf16.gmra.mxu0 %v588
  %v1682 = vpop.f32.mrf.mxu0
  %v1683 = vadd.f32 0.0, %v1682
  %v1684 = vpop.f32.mrf.mxu0
  %v1685 = vadd.f32 0.0, %v1684
  %1686 = vmatmul.bf16.gmra.mxu0 %v597
  %v1687 = vpop.f32.mrf.mxu0
  %v1688 = vadd.f32 0.0, %v1687
  %v1689 = vpop.f32.mrf.mxu0
  %v1690 = vadd.f32 0.0, %v1689
  %1691 = vmatmul.bf16.gmra.mxu0 %v606
  %v1692 = vpop.f32.mrf.mxu0
  %v1693 = vadd.f32 0.0, %v1692
  %v1694 = vpop.f32.mrf.mxu0
  %v1695 = vadd.f32 0.0, %v1694
  %1696 = vmatmul.bf16.gmra.mxu0 %v615
  %v1697 = vpop.f32.mrf.mxu0
  %v1698 = vadd.f32 0.0, %v1697
  %v1699 = vpop.f32.mrf.mxu0
  %v1700 = vadd.f32 0.0, %v1699
  %1701 = vmatmul.bf16.gmra.mxu0 %v624
  %v1702 = vpop.f32.mrf.mxu0
  %v1703 = vadd.f32 0.0, %v1702
  %v1704 = vpop.f32.mrf.mxu0
  %v1705 = vadd.f32 0.0, %v1704
  %1706 = vmatmul.bf16.gmra.mxu0 %v633
  %v1707 = vpop.f32.mrf.mxu0
  %v1708 = vadd.f32 0.0, %v1707
  %v1709 = vpop.f32.mrf.mxu0
  %v1710 = vadd.f32 0.0, %v1709
  %1711 = vdwg.mxu0
  %1712 = vmatpush.bf16.msra.mxu0 %v937
  %1713 = vmatpush.bf16.msra.mxu0 %v935
  %1714 = vmatpush.bf16.msra.mxu0 %v933
  %1715 = vmatpush.bf16.msra.mxu0 %v931
  %1716 = vmatpush.bf16.msra.mxu0 %v929
  %1717 = vmatpush.bf16.msra.mxu0 %v927
  %1718 = vmatpush.bf16.msra.mxu0 %v925
  %1719 = vmatpush.bf16.msra.mxu0 %v923
  %1720 = vmatmul.bf16.gmra.mxu0 %v544
  %v1721 = vpop.f32.mrf.mxu0
  %v1722 = vadd.f32 %v1658, %v1721
  %v1723 = vpop.f32.mrf.mxu0
  %v1724 = vadd.f32 %v1660, %v1723
  %1725 = vmatmul.bf16.gmra.mxu0 %v553
  %v1726 = vpop.f32.mrf.mxu0
  %v1727 = vadd.f32 %v1663, %v1726
  %v1728 = vpop.f32.mrf.mxu0
  %v1729 = vadd.f32 %v1665, %v1728
  %1730 = vmatmul.bf16.gmra.mxu0 %v562
  %v1731 = vpop.f32.mrf.mxu0
  %v1732 = vadd.f32 %v1668, %v1731
  %v1733 = vpop.f32.mrf.mxu0
  %v1734 = vadd.f32 %v1670, %v1733
  %1735 = vmatmul.bf16.gmra.mxu0 %v571
  %v1736 = vpop.f32.mrf.mxu0
  %v1737 = vadd.f32 %v1673, %v1736
  %v1738 = vpop.f32.mrf.mxu0
  %v1739 = vadd.f32 %v1675, %v1738
  %1740 = vmatmul.bf16.gmra.mxu0 %v580
  %v1741 = vpop.f32.mrf.mxu0
  %v1742 = vadd.f32 %v1678, %v1741
  %v1743 = vpop.f32.mrf.mxu0
  %v1744 = vadd.f32 %v1680, %v1743
  %1745 = vmatmul.bf16.gmra.mxu0 %v589
  %v1746 = vpop.f32.mrf.mxu0
  %v1747 = vadd.f32 %v1683, %v1746
  %v1748 = vpop.f32.mrf.mxu0
  %v1749 = vadd.f32 %v1685, %v1748
  %1750 = vmatmul.bf16.gmra.mxu0 %v598
  %v1751 = vpop.f32.mrf.mxu0
  %v1752 = vadd.f32 %v1688, %v1751
  %v1753 = vpop.f32.mrf.mxu0
  %v1754 = vadd.f32 %v1690, %v1753
  %1755 = vmatmul.bf16.gmra.mxu0 %v607
  %v1756 = vpop.f32.mrf.mxu0
  %v1757 = vadd.f32 %v1693, %v1756
  %v1758 = vpop.f32.mrf.mxu0
  %v1759 = vadd.f32 %v1695, %v1758
  %1760 = vmatmul.bf16.gmra.mxu0 %v616
  %v1761 = vpop.f32.mrf.mxu0
  %v1762 = vadd.f32 %v1698, %v1761
  %v1763 = vpop.f32.mrf.mxu0
  %v1764 = vadd.f32 %v1700, %v1763
  %1765 = vmatmul.bf16.gmra.mxu0 %v625
  %v1766 = vpop.f32.mrf.mxu0
  %v1767 = vadd.f32 %v1703, %v1766
  %v1768 = vpop.f32.mrf.mxu0
  %v1769 = vadd.f32 %v1705, %v1768
  %1770 = vmatmul.bf16.gmra.mxu0 %v634
  %v1771 = vpop.f32.mrf.mxu0
  %v1772 = vadd.f32 %v1708, %v1771
  %v1773 = vpop.f32.mrf.mxu0
  %v1774 = vadd.f32 %v1710, %v1773
  %1775 = vdwg.mxu0
  %1776 = vmatpush.bf16.msra.mxu0 %v953
  %1777 = vmatpush.bf16.msra.mxu0 %v951
  %1778 = vmatpush.bf16.msra.mxu0 %v949
  %1779 = vmatpush.bf16.msra.mxu0 %v947
  %1780 = vmatpush.bf16.msra.mxu0 %v945
  %1781 = vmatpush.bf16.msra.mxu0 %v943
  %1782 = vmatpush.bf16.msra.mxu0 %v941
  %1783 = vmatpush.bf16.msra.mxu0 %v939
  %1784 = vmatmul.bf16.gmra.mxu0 %v545
  %v1785 = vpop.f32.mrf.mxu0
  %v1786 = vadd.f32 %v1722, %v1785
  %v1787 = vpop.f32.mrf.mxu0
  %v1788 = vadd.f32 %v1724, %v1787
  %1789 = vmatmul.bf16.gmra.mxu0 %v554
  %v1790 = vpop.f32.mrf.mxu0
  %v1791 = vadd.f32 %v1727, %v1790
  %v1792 = vpop.f32.mrf.mxu0
  %v1793 = vadd.f32 %v1729, %v1792
  %1794 = vmatmul.bf16.gmra.mxu0 %v563
  %v1795 = vpop.f32.mrf.mxu0
  %v1796 = vadd.f32 %v1732, %v1795
  %v1797 = vpop.f32.mrf.mxu0
  %v1798 = vadd.f32 %v1734, %v1797
  %1799 = vmatmul.bf16.gmra.mxu0 %v572
  %v1800 = vpop.f32.mrf.mxu0
  %v1801 = vadd.f32 %v1737, %v1800
  %v1802 = vpop.f32.mrf.mxu0
  %v1803 = vadd.f32 %v1739, %v1802
  %1804 = vmatmul.bf16.gmra.mxu0 %v581
  %v1805 = vpop.f32.mrf.mxu0
  %v1806 = vadd.f32 %v1742, %v1805
  %v1807 = vpop.f32.mrf.mxu0
  %v1808 = vadd.f32 %v1744, %v1807
  %1809 = vmatmul.bf16.gmra.mxu0 %v590
  %v1810 = vpop.f32.mrf.mxu0
  %v1811 = vadd.f32 %v1747, %v1810
  %v1812 = vpop.f32.mrf.mxu0
  %v1813 = vadd.f32 %v1749, %v1812
  %1814 = vmatmul.bf16.gmra.mxu0 %v599
  %v1815 = vpop.f32.mrf.mxu0
  %v1816 = vadd.f32 %v1752, %v1815
  %v1817 = vpop.f32.mrf.mxu0
  %v1818 = vadd.f32 %v1754, %v1817
  %1819 = vmatmul.bf16.gmra.mxu0 %v608
  %v1820 = vpop.f32.mrf.mxu0
  %v1821 = vadd.f32 %v1757, %v1820
  %v1822 = vpop.f32.mrf.mxu0
  %v1823 = vadd.f32 %v1759, %v1822
  %1824 = vmatmul.bf16.gmra.mxu0 %v617
  %v1825 = vpop.f32.mrf.mxu0
  %v1826 = vadd.f32 %v1762, %v1825
  %v1827 = vpop.f32.mrf.mxu0
  %v1828 = vadd.f32 %v1764, %v1827
  %1829 = vmatmul.bf16.gmra.mxu0 %v626
  %v1830 = vpop.f32.mrf.mxu0
  %v1831 = vadd.f32 %v1767, %v1830
  %v1832 = vpop.f32.mrf.mxu0
  %v1833 = vadd.f32 %v1769, %v1832
  %1834 = vmatmul.bf16.gmra.mxu0 %v635
  %v1835 = vpop.f32.mrf.mxu0
  %v1836 = vadd.f32 %v1772, %v1835
  %v1837 = vpop.f32.mrf.mxu0
  %v1838 = vadd.f32 %v1774, %v1837
  %1839 = vdwg.mxu0
  %1840 = vmatpush.bf16.msra.mxu0 %v969
  %1841 = vmatpush.bf16.msra.mxu0 %v967
  %1842 = vmatpush.bf16.msra.mxu0 %v965
  %1843 = vmatpush.bf16.msra.mxu0 %v963
  %1844 = vmatpush.bf16.msra.mxu0 %v961
  %1845 = vmatpush.bf16.msra.mxu0 %v959
  %1846 = vmatpush.bf16.msra.mxu0 %v957
  %1847 = vmatpush.bf16.msra.mxu0 %v955
  %1848 = vmatmul.bf16.gmra.mxu0 %v546
  %v1849 = vpop.f32.mrf.mxu0
  %v1850 = vadd.f32 %v1786, %v1849
  %v1851 = vpop.f32.mrf.mxu0
  %v1852 = vadd.f32 %v1788, %v1851
  %1853 = vmatmul.bf16.gmra.mxu0 %v555
  %v1854 = vpop.f32.mrf.mxu0
  %v1855 = vadd.f32 %v1791, %v1854
  %v1856 = vpop.f32.mrf.mxu0
  %v1857 = vadd.f32 %v1793, %v1856
  %1858 = vmatmul.bf16.gmra.mxu0 %v564
  %v1859 = vpop.f32.mrf.mxu0
  %v1860 = vadd.f32 %v1796, %v1859
  %v1861 = vpop.f32.mrf.mxu0
  %v1862 = vadd.f32 %v1798, %v1861
  %1863 = vmatmul.bf16.gmra.mxu0 %v573
  %v1864 = vpop.f32.mrf.mxu0
  %v1865 = vadd.f32 %v1801, %v1864
  %v1866 = vpop.f32.mrf.mxu0
  %v1867 = vadd.f32 %v1803, %v1866
  %1868 = vmatmul.bf16.gmra.mxu0 %v582
  %v1869 = vpop.f32.mrf.mxu0
  %v1870 = vadd.f32 %v1806, %v1869
  %v1871 = vpop.f32.mrf.mxu0
  %v1872 = vadd.f32 %v1808, %v1871
  %1873 = vmatmul.bf16.gmra.mxu0 %v591
  %v1874 = vpop.f32.mrf.mxu0
  %v1875 = vadd.f32 %v1811, %v1874
  %v1876 = vpop.f32.mrf.mxu0
  %v1877 = vadd.f32 %v1813, %v1876
  %1878 = vmatmul.bf16.gmra.mxu0 %v600
  %v1879 = vpop.f32.mrf.mxu0
  %v1880 = vadd.f32 %v1816, %v1879
  %v1881 = vpop.f32.mrf.mxu0
  %v1882 = vadd.f32 %v1818, %v1881
  %1883 = vmatmul.bf16.gmra.mxu0 %v609
  %v1884 = vpop.f32.mrf.mxu0
  %v1885 = vadd.f32 %v1821, %v1884
  %v1886 = vpop.f32.mrf.mxu0
  %v1887 = vadd.f32 %v1823, %v1886
  %1888 = vmatmul.bf16.gmra.mxu0 %v618
  %v1889 = vpop.f32.mrf.mxu0
  %v1890 = vadd.f32 %v1826, %v1889
  %v1891 = vpop.f32.mrf.mxu0
  %v1892 = vadd.f32 %v1828, %v1891
  %1893 = vmatmul.bf16.gmra.mxu0 %v627
  %v1894 = vpop.f32.mrf.mxu0
  %v1895 = vadd.f32 %v1831, %v1894
  %v1896 = vpop.f32.mrf.mxu0
  %v1897 = vadd.f32 %v1833, %v1896
  %1898 = vmatmul.bf16.gmra.mxu0 %v636
  %v1899 = vpop.f32.mrf.mxu0
  %v1900 = vadd.f32 %v1836, %v1899
  %v1901 = vpop.f32.mrf.mxu0
  %v1902 = vadd.f32 %v1838, %v1901
  %1903 = vdwg.mxu0
  %1904 = vmatpush.bf16.msra.mxu0 %v985
  %1905 = vmatpush.bf16.msra.mxu0 %v983
  %1906 = vmatpush.bf16.msra.mxu0 %v981
  %1907 = vmatpush.bf16.msra.mxu0 %v979
  %1908 = vmatpush.bf16.msra.mxu0 %v977
  %1909 = vmatpush.bf16.msra.mxu0 %v975
  %1910 = vmatpush.bf16.msra.mxu0 %v973
  %1911 = vmatpush.bf16.msra.mxu0 %v971
  %1912 = vmatmul.bf16.gmra.mxu0 %v547
  %v1913 = vpop.f32.mrf.mxu0
  %v1914 = vadd.f32 %v1850, %v1913
  %v1915 = vpop.f32.mrf.mxu0
  %v1916 = vadd.f32 %v1852, %v1915
  %1917 = vmatmul.bf16.gmra.mxu0 %v556
  %v1918 = vpop.f32.mrf.mxu0
  %v1919 = vadd.f32 %v1855, %v1918
  %v1920 = vpop.f32.mrf.mxu0
  %v1921 = vadd.f32 %v1857, %v1920
  %1922 = vmatmul.bf16.gmra.mxu0 %v565
  %v1923 = vpop.f32.mrf.mxu0
  %v1924 = vadd.f32 %v1860, %v1923
  %v1925 = vpop.f32.mrf.mxu0
  %v1926 = vadd.f32 %v1862, %v1925
  %1927 = vmatmul.bf16.gmra.mxu0 %v574
  %v1928 = vpop.f32.mrf.mxu0
  %v1929 = vadd.f32 %v1865, %v1928
  %v1930 = vpop.f32.mrf.mxu0
  %v1931 = vadd.f32 %v1867, %v1930
  %1932 = vmatmul.bf16.gmra.mxu0 %v583
  %v1933 = vpop.f32.mrf.mxu0
  %v1934 = vadd.f32 %v1870, %v1933
  %v1935 = vpop.f32.mrf.mxu0
  %v1936 = vadd.f32 %v1872, %v1935
  %1937 = vmatmul.bf16.gmra.mxu0 %v592
  %v1938 = vpop.f32.mrf.mxu0
  %v1939 = vadd.f32 %v1875, %v1938
  %v1940 = vpop.f32.mrf.mxu0
  %v1941 = vadd.f32 %v1877, %v1940
  %1942 = vmatmul.bf16.gmra.mxu0 %v601
  %v1943 = vpop.f32.mrf.mxu0
  %v1944 = vadd.f32 %v1880, %v1943
  %v1945 = vpop.f32.mrf.mxu0
  %v1946 = vadd.f32 %v1882, %v1945
  %1947 = vmatmul.bf16.gmra.mxu0 %v610
  %v1948 = vpop.f32.mrf.mxu0
  %v1949 = vadd.f32 %v1885, %v1948
  %v1950 = vpop.f32.mrf.mxu0
  %v1951 = vadd.f32 %v1887, %v1950
  %1952 = vmatmul.bf16.gmra.mxu0 %v619
  %v1953 = vpop.f32.mrf.mxu0
  %v1954 = vadd.f32 %v1890, %v1953
  %v1955 = vpop.f32.mrf.mxu0
  %v1956 = vadd.f32 %v1892, %v1955
  %1957 = vmatmul.bf16.gmra.mxu0 %v628
  %v1958 = vpop.f32.mrf.mxu0
  %v1959 = vadd.f32 %v1895, %v1958
  %v1960 = vpop.f32.mrf.mxu0
  %v1961 = vadd.f32 %v1897, %v1960
  %1962 = vmatmul.bf16.gmra.mxu0 %v637
  %v1963 = vpop.f32.mrf.mxu0
  %v1964 = vadd.f32 %v1900, %v1963
  %v1965 = vpop.f32.mrf.mxu0
  %v1966 = vadd.f32 %v1902, %v1965
  %1967 = vdwg.mxu0
  %1968 = vmatpush.bf16.msra.mxu0 %v1001
  %1969 = vmatpush.bf16.msra.mxu0 %v999
  %1970 = vmatpush.bf16.msra.mxu0 %v997
  %1971 = vmatpush.bf16.msra.mxu0 %v995
  %1972 = vmatpush.bf16.msra.mxu0 %v993
  %1973 = vmatpush.bf16.msra.mxu0 %v991
  %1974 = vmatpush.bf16.msra.mxu0 %v989
  %1975 = vmatpush.bf16.msra.mxu0 %v987
  %1976 = vmatmul.bf16.gmra.mxu0 %v548
  %v1977 = vpop.f32.mrf.mxu0
  %v1978 = vadd.f32 %v1914, %v1977
  %v1979 = vpop.f32.mrf.mxu0
  %v1980 = vadd.f32 %v1916, %v1979
  %1981 = vmatmul.bf16.gmra.mxu0 %v557
  %v1982 = vpop.f32.mrf.mxu0
  %v1983 = vadd.f32 %v1919, %v1982
  %v1984 = vpop.f32.mrf.mxu0
  %v1985 = vadd.f32 %v1921, %v1984
  %1986 = vmatmul.bf16.gmra.mxu0 %v566
  %v1987 = vpop.f32.mrf.mxu0
  %v1988 = vadd.f32 %v1924, %v1987
  %v1989 = vpop.f32.mrf.mxu0
  %v1990 = vadd.f32 %v1926, %v1989
  %1991 = vmatmul.bf16.gmra.mxu0 %v575
  %v1992 = vpop.f32.mrf.mxu0
  %v1993 = vadd.f32 %v1929, %v1992
  %v1994 = vpop.f32.mrf.mxu0
  %v1995 = vadd.f32 %v1931, %v1994
  %1996 = vmatmul.bf16.gmra.mxu0 %v584
  %v1997 = vpop.f32.mrf.mxu0
  %v1998 = vadd.f32 %v1934, %v1997
  %v1999 = vpop.f32.mrf.mxu0
  %v2000 = vadd.f32 %v1936, %v1999
  %2001 = vmatmul.bf16.gmra.mxu0 %v593
  %v2002 = vpop.f32.mrf.mxu0
  %v2003 = vadd.f32 %v1939, %v2002
  %v2004 = vpop.f32.mrf.mxu0
  %v2005 = vadd.f32 %v1941, %v2004
  %2006 = vmatmul.bf16.gmra.mxu0 %v602
  %v2007 = vpop.f32.mrf.mxu0
  %v2008 = vadd.f32 %v1944, %v2007
  %v2009 = vpop.f32.mrf.mxu0
  %v2010 = vadd.f32 %v1946, %v2009
  %2011 = vmatmul.bf16.gmra.mxu0 %v611
  %v2012 = vpop.f32.mrf.mxu0
  %v2013 = vadd.f32 %v1949, %v2012
  %v2014 = vpop.f32.mrf.mxu0
  %v2015 = vadd.f32 %v1951, %v2014
  %2016 = vmatmul.bf16.gmra.mxu0 %v620
  %v2017 = vpop.f32.mrf.mxu0
  %v2018 = vadd.f32 %v1954, %v2017
  %v2019 = vpop.f32.mrf.mxu0
  %v2020 = vadd.f32 %v1956, %v2019
  %2021 = vmatmul.bf16.gmra.mxu0 %v629
  %v2022 = vpop.f32.mrf.mxu0
  %v2023 = vadd.f32 %v1959, %v2022
  %v2024 = vpop.f32.mrf.mxu0
  %v2025 = vadd.f32 %v1961, %v2024
  %2026 = vmatmul.bf16.gmra.mxu0 %v638
  %v2027 = vpop.f32.mrf.mxu0
  %v2028 = vadd.f32 %v1964, %v2027
  %v2029 = vpop.f32.mrf.mxu0
  %v2030 = vadd.f32 %v1966, %v2029
  %2031 = vdwg.mxu0
  %2032 = vmatpush.bf16.msra.mxu0 %v1017
  %2033 = vmatpush.bf16.msra.mxu0 %v1015
  %2034 = vmatpush.bf16.msra.mxu0 %v1013
  %2035 = vmatpush.bf16.msra.mxu0 %v1011
  %2036 = vmatpush.bf16.msra.mxu0 %v1009
  %2037 = vmatpush.bf16.msra.mxu0 %v1007
  %2038 = vmatpush.bf16.msra.mxu0 %v1005
  %2039 = vmatpush.bf16.msra.mxu0 %v1003
  %2040 = vmatmul.bf16.gmra.mxu0 %v549
  %v2041 = vpop.f32.mrf.mxu0
  %v2042 = vadd.f32 %v1978, %v2041
  %v2043 = vpop.f32.mrf.mxu0
  %v2044 = vadd.f32 %v1980, %v2043
  %2045 = vmatmul.bf16.gmra.mxu0 %v558
  %v2046 = vpop.f32.mrf.mxu0
  %v2047 = vadd.f32 %v1983, %v2046
  %v2048 = vpop.f32.mrf.mxu0
  %v2049 = vadd.f32 %v1985, %v2048
  %2050 = vmatmul.bf16.gmra.mxu0 %v567
  %v2051 = vpop.f32.mrf.mxu0
  %v2052 = vadd.f32 %v1988, %v2051
  %v2053 = vpop.f32.mrf.mxu0
  %v2054 = vadd.f32 %v1990, %v2053
  %2055 = vmatmul.bf16.gmra.mxu0 %v576
  %v2056 = vpop.f32.mrf.mxu0
  %v2057 = vadd.f32 %v1993, %v2056
  %v2058 = vpop.f32.mrf.mxu0
  %v2059 = vadd.f32 %v1995, %v2058
  %2060 = vmatmul.bf16.gmra.mxu0 %v585
  %v2061 = vpop.f32.mrf.mxu0
  %v2062 = vadd.f32 %v1998, %v2061
  %v2063 = vpop.f32.mrf.mxu0
  %v2064 = vadd.f32 %v2000, %v2063
  %2065 = vmatmul.bf16.gmra.mxu0 %v594
  %v2066 = vpop.f32.mrf.mxu0
  %v2067 = vadd.f32 %v2003, %v2066
  %v2068 = vpop.f32.mrf.mxu0
  %v2069 = vadd.f32 %v2005, %v2068
  %2070 = vmatmul.bf16.gmra.mxu0 %v603
  %v2071 = vpop.f32.mrf.mxu0
  %v2072 = vadd.f32 %v2008, %v2071
  %v2073 = vpop.f32.mrf.mxu0
  %v2074 = vadd.f32 %v2010, %v2073
  %2075 = vmatmul.bf16.gmra.mxu0 %v612
  %v2076 = vpop.f32.mrf.mxu0
  %v2077 = vadd.f32 %v2013, %v2076
  %v2078 = vpop.f32.mrf.mxu0
  %v2079 = vadd.f32 %v2015, %v2078
  %2080 = vmatmul.bf16.gmra.mxu0 %v621
  %v2081 = vpop.f32.mrf.mxu0
  %v2082 = vadd.f32 %v2018, %v2081
  %v2083 = vpop.f32.mrf.mxu0
  %v2084 = vadd.f32 %v2020, %v2083
  %2085 = vmatmul.bf16.gmra.mxu0 %v630
  %v2086 = vpop.f32.mrf.mxu0
  %v2087 = vadd.f32 %v2023, %v2086
  %v2088 = vpop.f32.mrf.mxu0
  %v2089 = vadd.f32 %v2025, %v2088
  %2090 = vmatmul.bf16.gmra.mxu0 %v639
  %v2091 = vpop.f32.mrf.mxu0
  %v2092 = vadd.f32 %v2028, %v2091
  %v2093 = vpop.f32.mrf.mxu0
  %v2094 = vadd.f32 %v2030, %v2093
  %2095 = vdwg.mxu0
  %2096 = vmatpush.bf16.msra.mxu0 %v1033
  %2097 = vmatpush.bf16.msra.mxu0 %v1031
  %2098 = vmatpush.bf16.msra.mxu0 %v1029
  %2099 = vmatpush.bf16.msra.mxu0 %v1027
  %2100 = vmatpush.bf16.msra.mxu0 %v1025
  %2101 = vmatpush.bf16.msra.mxu0 %v1023
  %2102 = vmatpush.bf16.msra.mxu0 %v1021
  %2103 = vmatpush.bf16.msra.mxu0 %v1019
  %2104 = vmatmul.bf16.gmra.mxu0 %v550
  %v2105 = vpop.f32.mrf.mxu0
  %v2106 = vadd.f32 %v2042, %v2105
  %v2107 = vpop.f32.mrf.mxu0
  %v2108 = vadd.f32 %v2044, %v2107
  %2109 = vmatmul.bf16.gmra.mxu0 %v559
  %v2110 = vpop.f32.mrf.mxu0
  %v2111 = vadd.f32 %v2047, %v2110
  %v2112 = vpop.f32.mrf.mxu0
  %v2113 = vadd.f32 %v2049, %v2112
  %2114 = vmatmul.bf16.gmra.mxu0 %v568
  %v2115 = vpop.f32.mrf.mxu0
  %v2116 = vadd.f32 %v2052, %v2115
  %v2117 = vpop.f32.mrf.mxu0
  %v2118 = vadd.f32 %v2054, %v2117
  %2119 = vmatmul.bf16.gmra.mxu0 %v577
  %v2120 = vpop.f32.mrf.mxu0
  %v2121 = vadd.f32 %v2057, %v2120
  %v2122 = vpop.f32.mrf.mxu0
  %v2123 = vadd.f32 %v2059, %v2122
  %2124 = vmatmul.bf16.gmra.mxu0 %v586
  %v2125 = vpop.f32.mrf.mxu0
  %v2126 = vadd.f32 %v2062, %v2125
  %v2127 = vpop.f32.mrf.mxu0
  %v2128 = vadd.f32 %v2064, %v2127
  %2129 = vmatmul.bf16.gmra.mxu0 %v595
  %v2130 = vpop.f32.mrf.mxu0
  %v2131 = vadd.f32 %v2067, %v2130
  %v2132 = vpop.f32.mrf.mxu0
  %v2133 = vadd.f32 %v2069, %v2132
  %2134 = vmatmul.bf16.gmra.mxu0 %v604
  %v2135 = vpop.f32.mrf.mxu0
  %v2136 = vadd.f32 %v2072, %v2135
  %v2137 = vpop.f32.mrf.mxu0
  %v2138 = vadd.f32 %v2074, %v2137
  %2139 = vmatmul.bf16.gmra.mxu0 %v613
  %v2140 = vpop.f32.mrf.mxu0
  %v2141 = vadd.f32 %v2077, %v2140
  %v2142 = vpop.f32.mrf.mxu0
  %v2143 = vadd.f32 %v2079, %v2142
  %2144 = vmatmul.bf16.gmra.mxu0 %v622
  %v2145 = vpop.f32.mrf.mxu0
  %v2146 = vadd.f32 %v2082, %v2145
  %v2147 = vpop.f32.mrf.mxu0
  %v2148 = vadd.f32 %v2084, %v2147
  %2149 = vmatmul.bf16.gmra.mxu0 %v631
  %v2150 = vpop.f32.mrf.mxu0
  %v2151 = vadd.f32 %v2087, %v2150
  %v2152 = vpop.f32.mrf.mxu0
  %v2153 = vadd.f32 %v2089, %v2152
  %2154 = vmatmul.bf16.gmra.mxu0 %v640
  %v2155 = vpop.f32.mrf.mxu0
  %v2156 = vadd.f32 %v2092, %v2155
  %v2157 = vpop.f32.mrf.mxu0
  %v2158 = vadd.f32 %v2094, %v2157
  %2159 = vdwg.mxu0
  %2160 = vmatpush.bf16.msra.mxu0 0
  %2161 = vmatpush.bf16.msra.mxu0 0
  %2162 = vmatpush.bf16.msra.mxu0 0
  %2163 = vmatpush.bf16.msra.mxu0 0
  %2164 = vmatpush.bf16.msra.mxu0 0
  %2165 = vmatpush.bf16.msra.mxu0 0
  %2166 = vmatpush.bf16.msra.mxu0 %v1037
  %2167 = vmatpush.bf16.msra.mxu0 %v1035
  %2168 = vmatmul.bf16.gmra.mxu0 %v1040
  %v2169 = vpop.f32.mrf.mxu0
  %v2170 = vadd.f32 %v2106, %v2169
  %v2171 = vpop.f32.mrf.mxu0
  %v2172 = vadd.f32 %v2108, %v2171
  %2173 = vmatmul.bf16.gmra.mxu0 %v1043
  %v2174 = vpop.f32.mrf.mxu0
  %v2175 = vadd.f32 %v2111, %v2174
  %v2176 = vpop.f32.mrf.mxu0
  %v2177 = vadd.f32 %v2113, %v2176
  %2178 = vmatmul.bf16.gmra.mxu0 %v1046
  %v2179 = vpop.f32.mrf.mxu0
  %v2180 = vadd.f32 %v2116, %v2179
  %v2181 = vpop.f32.mrf.mxu0
  %v2182 = vadd.f32 %v2118, %v2181
  %2183 = vmatmul.bf16.gmra.mxu0 %v1049
  %v2184 = vpop.f32.mrf.mxu0
  %v2185 = vadd.f32 %v2121, %v2184
  %v2186 = vpop.f32.mrf.mxu0
  %v2187 = vadd.f32 %v2123, %v2186
  %2188 = vmatmul.bf16.gmra.mxu0 %v1052
  %v2189 = vpop.f32.mrf.mxu0
  %v2190 = vadd.f32 %v2126, %v2189
  %v2191 = vpop.f32.mrf.mxu0
  %v2192 = vadd.f32 %v2128, %v2191
  %2193 = vmatmul.bf16.gmra.mxu0 %v1055
  %v2194 = vpop.f32.mrf.mxu0
  %v2195 = vadd.f32 %v2131, %v2194
  %v2196 = vpop.f32.mrf.mxu0
  %v2197 = vadd.f32 %v2133, %v2196
  %2198 = vmatmul.bf16.gmra.mxu0 %v1058
  %v2199 = vpop.f32.mrf.mxu0
  %v2200 = vadd.f32 %v2136, %v2199
  %v2201 = vpop.f32.mrf.mxu0
  %v2202 = vadd.f32 %v2138, %v2201
  %2203 = vmatmul.bf16.gmra.mxu0 %v1061
  %v2204 = vpop.f32.mrf.mxu0
  %v2205 = vadd.f32 %v2141, %v2204
  %v2206 = vpop.f32.mrf.mxu0
  %v2207 = vadd.f32 %v2143, %v2206
  %2208 = vmatmul.bf16.gmra.mxu0 %v1064
  %v2209 = vpop.f32.mrf.mxu0
  %v2210 = vadd.f32 %v2146, %v2209
  %v2211 = vpop.f32.mrf.mxu0
  %v2212 = vadd.f32 %v2148, %v2211
  %2213 = vmatmul.bf16.gmra.mxu0 %v1067
  %v2214 = vpop.f32.mrf.mxu0
  %v2215 = vadd.f32 %v2151, %v2214
  %v2216 = vpop.f32.mrf.mxu0
  %v2217 = vadd.f32 %v2153, %v2216
  %2218 = vmatmul.bf16.gmra.mxu0 %v1070
  %v2219 = vpop.f32.mrf.mxu0
  %v2220 = vadd.f32 %v2156, %v2219
  %v2221 = vpop.f32.mrf.mxu0
  %v2222 = vadd.f32 %v2158, %v2221
  %2223 = vdwg.mxu0
  %2224 = vst [vmem:[%s3] sm:$0xff] %v1594
  %vm2225 = vcmask 556032
  %2226 = vst.msk [vmem:[%s3 + $0x8] sm:$0xff] %vm2225, %v2170
  %2227 = vst [vmem:[%s3 + $0x10] sm:$0xff] %v1596
  %2228 = vst.msk [vmem:[%s3 + $0x18] sm:$0xff] %vm2225, %v2172
  %2229 = vst [vmem:[%s3 + $0x20] sm:$0xff] %v1599
  %2230 = vst.msk [vmem:[%s3 + $0x28] sm:$0xff] %vm2225, %v2175
  %2231 = vst [vmem:[%s3 + $0x30] sm:$0xff] %v1601
  %2232 = vst.msk [vmem:[%s3 + $0x38] sm:$0xff] %vm2225, %v2177
  %2233 = vst [vmem:[%s3 + $0x40] sm:$0xff] %v1604
  %2234 = vst.msk [vmem:[%s3 + $0x48] sm:$0xff] %vm2225, %v2180
  %2235 = vst [vmem:[%s3 + $0x50] sm:$0xff] %v1606
  %2236 = vst.msk [vmem:[%s3 + $0x58] sm:$0xff] %vm2225, %v2182
  %2237 = vst [vmem:[%s3 + $0x60] sm:$0xff] %v1609
  %2238 = vst.msk [vmem:[%s3 + $0x68] sm:$0xff] %vm2225, %v2185
  %2239 = vst [vmem:[%s3 + $0x70] sm:$0xff] %v1611
  %2240 = vst.msk [vmem:[%s3 + $0x78] sm:$0xff] %vm2225, %v2187
  %2241 = vst [vmem:[%s3 + $0x80] sm:$0xff] %v1614
  %2242 = vst.msk [vmem:[%s3 + $0x88] sm:$0xff] %vm2225, %v2190
  %2243 = vst [vmem:[%s3 + $0x90] sm:$0xff] %v1616
  %2244 = vst.msk [vmem:[%s3 + $0x98] sm:$0xff] %vm2225, %v2192
  %2245 = vst [vmem:[%s3 + $0xa0] sm:$0xff] %v1619
  %2246 = vst.msk [vmem:[%s3 + $0xa8] sm:$0xff] %vm2225, %v2195
  %2247 = vst [vmem:[%s3 + $0xb0] sm:$0xff] %v1621
  %2248 = vst.msk [vmem:[%s3 + $0xb8] sm:$0xff] %vm2225, %v2197
  %2249 = vst [vmem:[%s3 + $0xc0] sm:$0xff] %v1624
  %2250 = vst.msk [vmem:[%s3 + $0xc8] sm:$0xff] %vm2225, %v2200
  %2251 = vst [vmem:[%s3 + $0xd0] sm:$0xff] %v1626
  %2252 = vst.msk [vmem:[%s3 + $0xd8] sm:$0xff] %vm2225, %v2202
  %2253 = vst [vmem:[%s3 + $0xe0] sm:$0xff] %v1629
  %2254 = vst.msk [vmem:[%s3 + $0xe8] sm:$0xff] %vm2225, %v2205
  %2255 = vst [vmem:[%s3 + $0xf0] sm:$0xff] %v1631
  %2256 = vst.msk [vmem:[%s3 + $0xf8] sm:$0xff] %vm2225, %v2207
  %2257 = vst [vmem:[%s3 + $0x100] sm:$0xff] %v1634
  %2258 = vst.msk [vmem:[%s3 + $0x108] sm:$0xff] %vm2225, %v2210
  %2259 = vst [vmem:[%s3 + $0x110] sm:$0xff] %v1636
  %2260 = vst.msk [vmem:[%s3 + $0x118] sm:$0xff] %vm2225, %v2212
  %2261 = vst [vmem:[%s3 + $0x120] sm:$0xff] %v1639
  %2262 = vst.msk [vmem:[%s3 + $0x128] sm:$0xff] %vm2225, %v2215
  %2263 = vst [vmem:[%s3 + $0x130] sm:$0xff] %v1641
  %2264 = vst.msk [vmem:[%s3 + $0x138] sm:$0xff] %vm2225, %v2217
  %2265 = vst [vmem:[%s3 + $0x140] sm:$0xff] %v1644
  %2266 = vst.msk [vmem:[%s3 + $0x148] sm:$0xff] %vm2225, %v2220
  %2267 = vst [vmem:[%s3 + $0x150] sm:$0xff] %v1646
  %2268 = vst.msk [vmem:[%s3 + $0x158] sm:$0xff] %vm2225, %v2222
  // Predicated region
  $region14: #{scaled_pointwise_conv.1} parent=0 // pred_check
    _
  $region15: #{scaled_pointwise_conv.1} parent=0 // pred_check_branch
    %2270 = sbr.rel (0) target = $region17
  $region16: #{scaled_pointwise_conv.1} parent=0 // pred_region
    _
  $region17: #{scaled_pointwise_conv.1} parent=0 // pred_fallthru
    _
  // Predicated region
  $region18: #{scaled_pointwise_conv.1} parent=0 // pred_check
    _
  $region19: #{scaled_pointwise_conv.1} parent=0 // pred_check_branch
    %2272 = sbr.rel (0) target = $region21
  $region20: #{scaled_pointwise_conv.1} parent=0 // pred_region
    _
  $region21: #{scaled_pointwise_conv.1} parent=0 // pred_fallthru
    _

</llo_original>
